<compile_context>
chip_gen: v5e
topology: v5e:2x2
jax: 0.10.0
libtpu: 0.0.40
codegen_flags: <defaults>
</compile_context>

<pallas_src>
import jax
import jax.numpy as jnp
from jax import lax
from jax.experimental import pallas as pl
from jax.experimental.pallas import tpu as pltpu

EPS_NORM = 1e-8      # eps used by VSE-infty l1norm / l2norm
LN_EPS_HOR = 1e-5    # default nn.LayerNorm eps (Downsample blocks)
LN_EPS_OUT = 1e-12   # fc_out LayerNorm eps


def _round_up(x, m):
    return (x + m - 1) // m * m


# ----------------------------------------------------------------------------
# Fused kernel: downsample (all layers) + guidance + fc_out, for one N-tile.
# ----------------------------------------------------------------------------
def _sherl_fused_kernel(x_ref, hw_ref, hb_ref, hg_ref, hbe_ref,
                        aw_ref, ab_ref,
                        ow_ref, ob_ref, og_ref, obe_ref,
                        last_ref, gate_ref,
                        o_ref, feats):
    L = x_ref.shape[0]
    Lm1 = L - 1

    # ---------------- Phase 1: per-layer Linear(Din->H) + LayerNorm(H) --------
    inv_norm = []                                  # 1 / (||shallow_l|| + eps), (TN, 1)
    for l in range(L):
        x = x_ref[l]                               # (TN, Din) f32 or bf16
        w = hw_ref[l]                              # (Din, H)
        y = jnp.dot(x, w, preferred_element_type=jnp.float32) + hb_ref[l]
        # single-pass LayerNorm statistics (two independent lane reductions)
        mu = jnp.mean(y, axis=-1, keepdims=True)
        ms = jnp.mean(y * y, axis=-1, keepdims=True)
        var = jnp.maximum(ms - mu * mu, 0.0)       # biased variance, like torch LN
        y = (y - mu) * lax.rsqrt(var + LN_EPS_HOR)
        y = y * hg_ref[l] + hbe_ref[l]             # (TN, H), f32
        feats[l] = y                               # keep in VMEM scratch
        if l < Lm1:
            nrm = jnp.sqrt(jnp.sum(y * y, axis=-1, keepdims=True)) + EPS_NORM
            inv_norm.append(1.0 / nrm)

    deep = feats[Lm1]                              # (TN, H)

    # ---------------- Phase 2: guidance (per-row over the layer axis) ---------
    # redundancy[l] = sum_m relu(<s_l/|s_l|, s_m/|s_m|>) — symmetric pairwise,
    # computed directly in the (L, N, H) layout (no transpose, no einsum).
    red = [None] * Lm1
    for l in range(Lm1):
        s_l = feats[l]
        for m in range(l, Lm1):
            s_m = s_l if m == l else feats[m]
            d = jnp.sum(s_l * s_m, axis=-1, keepdims=True)          # (TN, 1)
            sim = jnp.maximum(d * (inv_norm[l] * inv_norm[m]), 0.0)
            red[l] = sim if red[l] is None else red[l] + sim
            if m != l:
                red[m] = sim if red[m] is None else red[m] + sim

    # cross-attention: Linear(H -> 1) applied to (shallow * deep)
    aw = aw_ref[...].astype(jnp.float32)           # (1, H) — broadcast hoisted
    ab = ab_ref[...]                               # (1, 1)
    dw = deep * aw                                 # (TN, H), reused for every layer
    cross = []
    for l in range(Lm1):
        c = jnp.sum(feats[l] * dw, axis=-1, keepdims=True) + ab     # (TN, 1)
        cross.append(jnp.maximum(c, 0.0) / red[l])
    denom = cross[0]
    for l in range(1, Lm1):
        denom = denom + cross[l]                   # cross >= 0, so sum == sum|.|
    inv_denom = 1.0 / (denom + EPS_NORM)           # l1norm over the layer axis

    guide = deep                                   # agg_features + guide_features
    for l in range(Lm1):
        guide = guide + (cross[l] * inv_denom) * feats[l]           # (TN, H)

    # ---------------- Phase 3: fc_out = ReLU -> Linear(H->Din) -> LN -> +gate*last
    xg = jnp.maximum(guide, 0.0)
    if xg.dtype != ow_ref.dtype:                   # bf16 weight path
        xg = xg.astype(ow_ref.dtype)
    y = jnp.dot(xg, ow_ref[...], preferred_element_type=jnp.float32) + ob_ref[...]
    mu = jnp.mean(y, axis=-1, keepdims=True)
    ms = jnp.mean(y * y, axis=-1, keepdims=True)
    var = jnp.maximum(ms - mu * mu, 0.0)
    y = (y - mu) * lax.rsqrt(var + LN_EPS_OUT)
    y = y * og_ref[...] + obe_ref[...]
    # TODO(synk): Dropout(p=0.1) is treated as eval-mode identity (no train-mode drop).
    o_ref[...] = y + gate_ref[...] * last_ref[...].astype(jnp.float32)


def _vmem_limit_bytes(L, TN, Din, H, act_itemsize):
    f32 = 4
    per_step = (L * TN * Din * act_itemsize        # x tile
                + TN * Din * act_itemsize          # last tile
                + TN * Din * f32)                  # out tile
    resident = (L * Din * H * act_itemsize         # hor_w
                + 3 * L * H * f32                  # hor b/g/beta
                + H * f32 + 1 * f32                # attn_w / attn_b
                + H * Din * act_itemsize           # out_w
                + 3 * Din * f32 + 1 * f32)         # out b/g/beta, gate
    scratch = L * TN * H * f32
    est = 2 * (per_step + resident) + scratch + (4 << 20)   # 2x for double-buffering
    return int(min(max(est, 16 << 20), 96 << 20))


# ----------------------------------------------------------------------------
# Parameters (deterministic, synthetic) and full forward
# ----------------------------------------------------------------------------
def init_params(key, num_layer, input_dim, hidden_dim):
    keys = jax.random.split(key, 6)
    return {
        # per-layer Downsample: Linear(Din->H) + LayerNorm(H)
        'hor_w':    jax.random.normal(keys[0], (num_layer, input_dim, hidden_dim), jnp.float32) * 0.02,
        'hor_b':    jax.random.normal(keys[1], (num_layer, 1, hidden_dim), jnp.float32) * 0.02,
        'hor_g':    jnp.ones((num_layer, 1, hidden_dim), jnp.float32),
        'hor_beta': jnp.zeros((num_layer, 1, hidden_dim), jnp.float32),
        # Guidance.fc_attn: Linear(H -> 1)
        'attn_w':   jax.random.normal(keys[2], (1, hidden_dim), jnp.float32) * 0.02,
        'attn_b':   jax.random.normal(keys[3], (1, 1), jnp.float32) * 0.02,
        # fc_out: Linear(H -> Din) + LayerNorm(Din)
        'out_w':    jax.random.normal(keys[4], (hidden_dim, input_dim), jnp.float32) * 0.02,
        'out_b':    jax.random.normal(keys[5], (1, input_dim), jnp.float32) * 0.02,
        'out_g':    jnp.ones((1, input_dim), jnp.float32),
        'out_beta': jnp.zeros((1, input_dim), jnp.float32),
        # gate_params initialized to 0 (as in the PyTorch module)
        'gate':     jnp.zeros((1, 1), jnp.float32),
    }


def sherl_forward(params, all_features_list, last_feature, gate_T=0.1,
                  tile_n=128, compute_dtype=jnp.float32):
    L = len(all_features_list)
    bs, n_inst, Din = all_features_list[0].shape
    H = params['hor_w'].shape[-1]
    N = bs * n_inst

    x_stack = jnp.stack(all_features_list, axis=0).reshape(L, N, Din)
    last2d = last_feature.reshape(N, Din)

    # ---- N tiling (padded rows are independent per-row work and sliced off) ----
    TN = min(_round_up(tile_n, 8), _round_up(N, 8))
    if compute_dtype == jnp.bfloat16:
        TN = _round_up(TN, 16)                     # bf16 sublane packing
    N_pad = _round_up(N, TN)
    if N_pad != N:
        x_stack = jnp.pad(x_stack, ((0, 0), (0, N_pad - N), (0, 0)))
        last2d = jnp.pad(last2d, ((0, N_pad - N), (0, 0)))
    num_tiles = N_pad // TN

    # ---- dtype split: matmul operands in compute_dtype, LN/guidance math in f32 ----
    x_stack = x_stack.astype(compute_dtype)
    last2d = last2d.astype(compute_dtype)
    hor_w = params['hor_w'].astype(compute_dtype)
    out_w = params['out_w'].astype(compute_dtype)

    gate = jnp.tanh(params['gate'] / gate_T)       # (1, 1)

    act_itemsize = jnp.dtype(compute_dtype).itemsize
    vmem_limit = _vmem_limit_bytes(L, TN, Din, H, act_itemsize)

    const3 = lambda i: (0, 0, 0)
    const2 = lambda i: (0, 0)

    out = pl.pallas_call(
        _sherl_fused_kernel,
        out_shape=jax.ShapeDtypeStruct((N_pad, Din), jnp.float32),
        grid=(num_tiles,),
        in_specs=[
            pl.BlockSpec((L, TN, Din), lambda i: (0, i, 0)),   # x (tiled over N)
            pl.BlockSpec((L, Din, H), const3),                 # hor_w   (resident)
            pl.BlockSpec((L, 1, H), const3),                   # hor_b
            pl.BlockSpec((L, 1, H), const3),                   # hor_g
            pl.BlockSpec((L, 1, H), const3),                   # hor_beta
            pl.BlockSpec((1, H), const2),                      # attn_w
            pl.BlockSpec((1, 1), const2),                      # attn_b
            pl.BlockSpec((H, Din), const2),                    # out_w
            pl.BlockSpec((1, Din), const2),                    # out_b
            pl.BlockSpec((1, Din), const2),                    # out_g
            pl.BlockSpec((1, Din), const2),                    # out_beta
            pl.BlockSpec((TN, Din), lambda i: (i, 0)),         # last (tiled over N)
            pl.BlockSpec((1, 1), const2),                      # gate
        ],
        out_specs=pl.BlockSpec((TN, Din), lambda i: (i, 0)),
        scratch_shapes=[pltpu.VMEM((L, TN, H), jnp.float32)],  # downsample outputs
        compiler_params=pltpu.CompilerParams(
            dimension_semantics=("parallel",),
            vmem_limit_bytes=vmem_limit),
    )(x_stack, hor_w, params['hor_b'], params['hor_g'], params['hor_beta'],
      params['attn_w'], params['attn_b'],
      out_w, params['out_b'], params['out_g'], params['out_beta'],
      last2d, gate)

    return out[:N].reshape(bs, n_inst, Din)


if __name__ == "__main__":
    # small shapes consistent with the module's forward
    num_layer = 4
    input_dim = 32
    embed_size = 16
    downsample_factor = 2
    hidden_dim = embed_size // downsample_factor   # 8
    bs, n_instance = 2, 8

    key = jax.random.PRNGKey(0)
    kp, kx, kl = jax.random.split(key, 3)
    params = init_params(kp, num_layer, input_dim, hidden_dim)

    xkeys = jax.random.split(kx, num_layer)
    all_features_list = [
        jax.random.normal(k, (bs, n_instance, input_dim), jnp.float32) for k in xkeys
    ]
    last_feature = jax.random.normal(kl, (bs, n_instance, input_dim), jnp.float32)

    # f32 reference-parity path
    out = sherl_forward(params, all_features_list, last_feature)
    out = jax.block_until_ready(out)
    assert out.shape == (bs, n_instance, input_dim)
    assert bool(jnp.all(jnp.isfinite(out)))

    # bf16 activation/weight path (v6e/v7x HBM-traffic optimization), LN stays f32
    out_bf16 = sherl_forward(params, all_features_list, last_feature,
                             compute_dtype=jnp.bfloat16)
    out_bf16 = jax.block_until_ready(out_bf16)
    assert out_bf16.shape == (bs, n_instance, input_dim)
    assert bool(jnp.all(jnp.isfinite(out_bf16)))

    print("KERNEL_OK")
</pallas_src>

<mosaic_0001>
module attributes {stable_mosaic.version = 11 : i64} {
  func.func @_sherl_fused_kernel(%arg0: i32, %arg1: memref<4x16x32xf32, #tpu.memory_space<vmem>>, %arg2: memref<4x32x8xf32, #tpu.memory_space<vmem>>, %arg3: memref<4x1x8xf32, #tpu.memory_space<vmem>>, %arg4: memref<4x1x8xf32, #tpu.memory_space<vmem>>, %arg5: memref<4x1x8xf32, #tpu.memory_space<vmem>>, %arg6: memref<1x8xf32, #tpu.memory_space<vmem>>, %arg7: memref<1x1xf32, #tpu.memory_space<vmem>>, %arg8: memref<8x32xf32, #tpu.memory_space<vmem>>, %arg9: memref<1x32xf32, #tpu.memory_space<vmem>>, %arg10: memref<1x32xf32, #tpu.memory_space<vmem>>, %arg11: memref<1x32xf32, #tpu.memory_space<vmem>>, %arg12: memref<16x32xf32, #tpu.memory_space<vmem>>, %arg13: memref<1x1xf32, #tpu.memory_space<vmem>>, %arg14: memref<16x32xf32, #tpu.memory_space<vmem>>, %arg15: memref<4x16x8xf32, #tpu.memory_space<vmem>>) attributes {dimension_semantics = [#tpu.dimension_semantics<parallel>], iteration_bounds = array<i64: 1>, scalar_prefetch = 0 : i64, scratch_operands = 1 : i64, tpu.core_type = #tpu.core_type<tc>, window_params = [{transform_indices = @transform_0, window_bounds = array<i64: 4, 16, 32>}, {pipeline_mode = #tpu.pipeline_mode<synchronous>, transform_indices = @transform_1, window_bounds = array<i64: 4, 32, 8>}, {pipeline_mode = #tpu.pipeline_mode<synchronous>, transform_indices = @transform_2, window_bounds = array<i64: 4, 1, 8>}, {pipeline_mode = #tpu.pipeline_mode<synchronous>, transform_indices = @transform_3, window_bounds = array<i64: 4, 1, 8>}, {pipeline_mode = #tpu.pipeline_mode<synchronous>, transform_indices = @transform_4, window_bounds = array<i64: 4, 1, 8>}, {pipeline_mode = #tpu.pipeline_mode<synchronous>, transform_indices = @transform_5, window_bounds = array<i64: 1, 8>}, {pipeline_mode = #tpu.pipeline_mode<synchronous>, transform_indices = @transform_6, window_bounds = array<i64: 1, 1>}, {pipeline_mode = #tpu.pipeline_mode<synchronous>, transform_indices = @transform_7, window_bounds = array<i64: 8, 32>}, {pipeline_mode = #tpu.pipeline_mode<synchronous>, transform_indices = @transform_8, window_bounds = array<i64: 1, 32>}, {pipeline_mode = #tpu.pipeline_mode<synchronous>, transform_indices = @transform_9, window_bounds = array<i64: 1, 32>}, {pipeline_mode = #tpu.pipeline_mode<synchronous>, transform_indices = @transform_10, window_bounds = array<i64: 1, 32>}, {transform_indices = @transform_11, window_bounds = array<i64: 16, 32>}, {pipeline_mode = #tpu.pipeline_mode<synchronous>, transform_indices = @transform_12, window_bounds = array<i64: 1, 1>}, {transform_indices = @transform_13, window_bounds = array<i64: 16, 32>}]} {
    %c0 = arith.constant 0 : index
    %c0_0 = arith.constant 0 : index
    %c0_1 = arith.constant 0 : index
    %0 = vector.load %arg1[%c0, %c0_0, %c0_1] : memref<4x16x32xf32, #tpu.memory_space<vmem>>, vector<1x16x32xf32>
    %1 = vector.shape_cast %0 : vector<1x16x32xf32> to vector<16x32xf32>
    %c0_2 = arith.constant 0 : index
    %c0_3 = arith.constant 0 : index
    %c0_4 = arith.constant 0 : index
    %2 = vector.load %arg2[%c0_2, %c0_3, %c0_4] : memref<4x32x8xf32, #tpu.memory_space<vmem>>, vector<1x32x8xf32>
    %3 = vector.shape_cast %2 : vector<1x32x8xf32> to vector<32x8xf32>
    %cst = arith.constant dense<0.000000e+00> : vector<16x8xf32>
    %4 = tpu.matmul %1, %3, %cst {dimension_numbers = #tpu.dot_dimension_numbers<[1], [0], [0], [1], [0, 0, 1, 1], [], []>} : vector<16x32xf32>, vector<32x8xf32>, vector<16x8xf32> -> vector<16x8xf32>
    %c0_5 = arith.constant 0 : index
    %c0_6 = arith.constant 0 : index
    %c0_7 = arith.constant 0 : index
    %5 = vector.load %arg3[%c0_5, %c0_6, %c0_7] : memref<4x1x8xf32, #tpu.memory_space<vmem>>, vector<1x1x8xf32>
    %6 = vector.shape_cast %5 : vector<1x1x8xf32> to vector<1x8xf32>
    %7 = vector.broadcast %6 : vector<1x8xf32> to vector<16x8xf32>
    %8 = arith.addf %4, %7 : vector<16x8xf32>
    %cst_8 = arith.constant dense<0.000000e+00> : vector<16xf32>
    %9 = vector.multi_reduction <add>, %8, %cst_8 [1] : vector<16x8xf32> to vector<16xf32>
    %10 = vector.shape_cast %9 : vector<16xf32> to vector<16x1xf32>
    %cst_9 = arith.constant 8.000000e+00 : f32
    %11 = vector.broadcast %cst_9 : f32 to vector<16x1xf32>
    %12 = arith.divf %10, %11 : vector<16x1xf32>
    %13 = arith.mulf %8, %8 : vector<16x8xf32>
    %cst_10 = arith.constant dense<0.000000e+00> : vector<16xf32>
    %14 = vector.multi_reduction <add>, %13, %cst_10 [1] : vector<16x8xf32> to vector<16xf32>
    %15 = vector.shape_cast %14 : vector<16xf32> to vector<16x1xf32>
    %cst_11 = arith.constant 8.000000e+00 : f32
    %16 = vector.broadcast %cst_11 : f32 to vector<16x1xf32>
    %17 = arith.divf %15, %16 : vector<16x1xf32>
    %18 = arith.mulf %12, %12 : vector<16x1xf32>
    %19 = arith.subf %17, %18 : vector<16x1xf32>
    %cst_12 = arith.constant 0.000000e+00 : f32
    %20 = vector.broadcast %cst_12 : f32 to vector<16x1xf32>
    %21 = arith.maximumf %19, %20 : vector<16x1xf32>
    %22 = vector.broadcast %12 : vector<16x1xf32> to vector<16x8xf32>
    %23 = arith.subf %8, %22 : vector<16x8xf32>
    %cst_13 = arith.constant 9.99999974E-6 : f32
    %24 = vector.broadcast %cst_13 : f32 to vector<16x1xf32>
    %25 = arith.addf %21, %24 : vector<16x1xf32>
    %26 = math.rsqrt %25 : vector<16x1xf32>
    %27 = vector.broadcast %26 : vector<16x1xf32> to vector<16x8xf32>
    %28 = arith.mulf %23, %27 : vector<16x8xf32>
    %c0_14 = arith.constant 0 : index
    %c0_15 = arith.constant 0 : index
    %c0_16 = arith.constant 0 : index
    %29 = vector.load %arg4[%c0_14, %c0_15, %c0_16] : memref<4x1x8xf32, #tpu.memory_space<vmem>>, vector<1x1x8xf32>
    %30 = vector.shape_cast %29 : vector<1x1x8xf32> to vector<1x8xf32>
    %31 = vector.broadcast %30 : vector<1x8xf32> to vector<16x8xf32>
    %32 = arith.mulf %28, %31 : vector<16x8xf32>
    %c0_17 = arith.constant 0 : index
    %c0_18 = arith.constant 0 : index
    %c0_19 = arith.constant 0 : index
    %33 = vector.load %arg5[%c0_17, %c0_18, %c0_19] : memref<4x1x8xf32, #tpu.memory_space<vmem>>, vector<1x1x8xf32>
    %34 = vector.shape_cast %33 : vector<1x1x8xf32> to vector<1x8xf32>
    %35 = vector.broadcast %34 : vector<1x8xf32> to vector<16x8xf32>
    %36 = arith.addf %32, %35 : vector<16x8xf32>
    %c0_20 = arith.constant 0 : index
    %c0_21 = arith.constant 0 : index
    %c0_22 = arith.constant 0 : index
    %37 = vector.load %arg15[%c0_20, %c0_21, %c0_22] : memref<4x16x8xf32, #tpu.memory_space<vmem>>, vector<1x16x8xf32>
    %38 = vector.shape_cast %37 : vector<1x16x8xf32> to vector<16x8xf32>
    %39 = vector.shape_cast %36 : vector<16x8xf32> to vector<1x16x8xf32>
    tpu.vector_store %arg15[%c0_20, %c0_21, %c0_22], %39 {strides = array<i32>} : memref<4x16x8xf32, #tpu.memory_space<vmem>>, vector<1x16x8xf32>,
    %40 = arith.mulf %36, %36 : vector<16x8xf32>
    %cst_23 = arith.constant dense<0.000000e+00> : vector<16xf32>
    %41 = vector.multi_reduction <add>, %40, %cst_23 [1] : vector<16x8xf32> to vector<16xf32>
    %42 = vector.shape_cast %41 : vector<16xf32> to vector<16x1xf32>
    %43 = math.sqrt %42 : vector<16x1xf32>
    %cst_24 = arith.constant 9.99999993E-9 : f32
    %44 = vector.broadcast %cst_24 : f32 to vector<16x1xf32>
    %45 = arith.addf %43, %44 : vector<16x1xf32>
    %cst_25 = arith.constant 1.000000e+00 : f32
    %46 = vector.broadcast %cst_25 : f32 to vector<16x1xf32>
    %47 = arith.divf %46, %45 : vector<16x1xf32>
    %c1 = arith.constant 1 : index
    %c0_26 = arith.constant 0 : index
    %c0_27 = arith.constant 0 : index
    %48 = vector.load %arg1[%c1, %c0_26, %c0_27] : memref<4x16x32xf32, #tpu.memory_space<vmem>>, vector<1x16x32xf32>
    %49 = vector.shape_cast %48 : vector<1x16x32xf32> to vector<16x32xf32>
    %c1_28 = arith.constant 1 : index
    %c0_29 = arith.constant 0 : index
    %c0_30 = arith.constant 0 : index
    %50 = vector.load %arg2[%c1_28, %c0_29, %c0_30] : memref<4x32x8xf32, #tpu.memory_space<vmem>>, vector<1x32x8xf32>
    %51 = vector.shape_cast %50 : vector<1x32x8xf32> to vector<32x8xf32>
    %cst_31 = arith.constant dense<0.000000e+00> : vector<16x8xf32>
    %52 = tpu.matmul %49, %51, %cst_31 {dimension_numbers = #tpu.dot_dimension_numbers<[1], [0], [0], [1], [0, 0, 1, 1], [], []>} : vector<16x32xf32>, vector<32x8xf32>, vector<16x8xf32> -> vector<16x8xf32>
    %c1_32 = arith.constant 1 : index
    %c0_33 = arith.constant 0 : index
    %c0_34 = arith.constant 0 : index
    %53 = vector.load %arg3[%c1_32, %c0_33, %c0_34] : memref<4x1x8xf32, #tpu.memory_space<vmem>>, vector<1x1x8xf32>
    %54 = vector.shape_cast %53 : vector<1x1x8xf32> to vector<1x8xf32>
    %55 = vector.broadcast %54 : vector<1x8xf32> to vector<16x8xf32>
    %56 = arith.addf %52, %55 : vector<16x8xf32>
    %cst_35 = arith.constant dense<0.000000e+00> : vector<16xf32>
    %57 = vector.multi_reduction <add>, %56, %cst_35 [1] : vector<16x8xf32> to vector<16xf32>
    %58 = vector.shape_cast %57 : vector<16xf32> to vector<16x1xf32>
    %cst_36 = arith.constant 8.000000e+00 : f32
    %59 = vector.broadcast %cst_36 : f32 to vector<16x1xf32>
    %60 = arith.divf %58, %59 : vector<16x1xf32>
    %61 = arith.mulf %56, %56 : vector<16x8xf32>
    %cst_37 = arith.constant dense<0.000000e+00> : vector<16xf32>
    %62 = vector.multi_reduction <add>, %61, %cst_37 [1] : vector<16x8xf32> to vector<16xf32>
    %63 = vector.shape_cast %62 : vector<16xf32> to vector<16x1xf32>
    %cst_38 = arith.constant 8.000000e+00 : f32
    %64 = vector.broadcast %cst_38 : f32 to vector<16x1xf32>
    %65 = arith.divf %63, %64 : vector<16x1xf32>
    %66 = arith.mulf %60, %60 : vector<16x1xf32>
    %67 = arith.subf %65, %66 : vector<16x1xf32>
    %cst_39 = arith.constant 0.000000e+00 : f32
    %68 = vector.broadcast %cst_39 : f32 to vector<16x1xf32>
    %69 = arith.maximumf %67, %68 : vector<16x1xf32>
    %70 = vector.broadcast %60 : vector<16x1xf32> to vector<16x8xf32>
    %71 = arith.subf %56, %70 : vector<16x8xf32>
    %cst_40 = arith.constant 9.99999974E-6 : f32
    %72 = vector.broadcast %cst_40 : f32 to vector<16x1xf32>
    %73 = arith.addf %69, %72 : vector<16x1xf32>
    %74 = math.rsqrt %73 : vector<16x1xf32>
    %75 = vector.broadcast %74 : vector<16x1xf32> to vector<16x8xf32>
    %76 = arith.mulf %71, %75 : vector<16x8xf32>
    %c1_41 = arith.constant 1 : index
    %c0_42 = arith.constant 0 : index
    %c0_43 = arith.constant 0 : index
    %77 = vector.load %arg4[%c1_41, %c0_42, %c0_43] : memref<4x1x8xf32, #tpu.memory_space<vmem>>, vector<1x1x8xf32>
    %78 = vector.shape_cast %77 : vector<1x1x8xf32> to vector<1x8xf32>
    %79 = vector.broadcast %78 : vector<1x8xf32> to vector<16x8xf32>
    %80 = arith.mulf %76, %79 : vector<16x8xf32>
    %c1_44 = arith.constant 1 : index
    %c0_45 = arith.constant 0 : index
    %c0_46 = arith.constant 0 : index
    %81 = vector.load %arg5[%c1_44, %c0_45, %c0_46] : memref<4x1x8xf32, #tpu.memory_space<vmem>>, vector<1x1x8xf32>
    %82 = vector.shape_cast %81 : vector<1x1x8xf32> to vector<1x8xf32>
    %83 = vector.broadcast %82 : vector<1x8xf32> to vector<16x8xf32>
    %84 = arith.addf %80, %83 : vector<16x8xf32>
    %c1_47 = arith.constant 1 : index
    %c0_48 = arith.constant 0 : index
    %c0_49 = arith.constant 0 : index
    %85 = vector.load %arg15[%c1_47, %c0_48, %c0_49] : memref<4x16x8xf32, #tpu.memory_space<vmem>>, vector<1x16x8xf32>
    %86 = vector.shape_cast %85 : vector<1x16x8xf32> to vector<16x8xf32>
    %87 = vector.shape_cast %84 : vector<16x8xf32> to vector<1x16x8xf32>
    tpu.vector_store %arg15[%c1_47, %c0_48, %c0_49], %87 {strides = array<i32>} : memref<4x16x8xf32, #tpu.memory_space<vmem>>, vector<1x16x8xf32>,
    %88 = arith.mulf %84, %84 : vector<16x8xf32>
    %cst_50 = arith.constant dense<0.000000e+00> : vector<16xf32>
    %89 = vector.multi_reduction <add>, %88, %cst_50 [1] : vector<16x8xf32> to vector<16xf32>
    %90 = vector.shape_cast %89 : vector<16xf32> to vector<16x1xf32>
    %91 = math.sqrt %90 : vector<16x1xf32>
    %cst_51 = arith.constant 9.99999993E-9 : f32
    %92 = vector.broadcast %cst_51 : f32 to vector<16x1xf32>
    %93 = arith.addf %91, %92 : vector<16x1xf32>
    %cst_52 = arith.constant 1.000000e+00 : f32
    %94 = vector.broadcast %cst_52 : f32 to vector<16x1xf32>
    %95 = arith.divf %94, %93 : vector<16x1xf32>
    %c2 = arith.constant 2 : index
    %c0_53 = arith.constant 0 : index
    %c0_54 = arith.constant 0 : index
    %96 = vector.load %arg1[%c2, %c0_53, %c0_54] : memref<4x16x32xf32, #tpu.memory_space<vmem>>, vector<1x16x32xf32>
    %97 = vector.shape_cast %96 : vector<1x16x32xf32> to vector<16x32xf32>
    %c2_55 = arith.constant 2 : index
    %c0_56 = arith.constant 0 : index
    %c0_57 = arith.constant 0 : index
    %98 = vector.load %arg2[%c2_55, %c0_56, %c0_57] : memref<4x32x8xf32, #tpu.memory_space<vmem>>, vector<1x32x8xf32>
    %99 = vector.shape_cast %98 : vector<1x32x8xf32> to vector<32x8xf32>
    %cst_58 = arith.constant dense<0.000000e+00> : vector<16x8xf32>
    %100 = tpu.matmul %97, %99, %cst_58 {dimension_numbers = #tpu.dot_dimension_numbers<[1], [0], [0], [1], [0, 0, 1, 1], [], []>} : vector<16x32xf32>, vector<32x8xf32>, vector<16x8xf32> -> vector<16x8xf32>
    %c2_59 = arith.constant 2 : index
    %c0_60 = arith.constant 0 : index
    %c0_61 = arith.constant 0 : index
    %101 = vector.load %arg3[%c2_59, %c0_60, %c0_61] : memref<4x1x8xf32, #tpu.memory_space<vmem>>, vector<1x1x8xf32>
    %102 = vector.shape_cast %101 : vector<1x1x8xf32> to vector<1x8xf32>
    %103 = vector.broadcast %102 : vector<1x8xf32> to vector<16x8xf32>
    %104 = arith.addf %100, %103 : vector<16x8xf32>
    %cst_62 = arith.constant dense<0.000000e+00> : vector<16xf32>
    %105 = vector.multi_reduction <add>, %104, %cst_62 [1] : vector<16x8xf32> to vector<16xf32>
    %106 = vector.shape_cast %105 : vector<16xf32> to vector<16x1xf32>
    %cst_63 = arith.constant 8.000000e+00 : f32
    %107 = vector.broadcast %cst_63 : f32 to vector<16x1xf32>
    %108 = arith.divf %106, %107 : vector<16x1xf32>
    %109 = arith.mulf %104, %104 : vector<16x8xf32>
    %cst_64 = arith.constant dense<0.000000e+00> : vector<16xf32>
    %110 = vector.multi_reduction <add>, %109, %cst_64 [1] : vector<16x8xf32> to vector<16xf32>
    %111 = vector.shape_cast %110 : vector<16xf32> to vector<16x1xf32>
    %cst_65 = arith.constant 8.000000e+00 : f32
    %112 = vector.broadcast %cst_65 : f32 to vector<16x1xf32>
    %113 = arith.divf %111, %112 : vector<16x1xf32>
    %114 = arith.mulf %108, %108 : vector<16x1xf32>
    %115 = arith.subf %113, %114 : vector<16x1xf32>
    %cst_66 = arith.constant 0.000000e+00 : f32
    %116 = vector.broadcast %cst_66 : f32 to vector<16x1xf32>
    %117 = arith.maximumf %115, %116 : vector<16x1xf32>
    %118 = vector.broadcast %108 : vector<16x1xf32> to vector<16x8xf32>
    %119 = arith.subf %104, %118 : vector<16x8xf32>
    %cst_67 = arith.constant 9.99999974E-6 : f32
    %120 = vector.broadcast %cst_67 : f32 to vector<16x1xf32>
    %121 = arith.addf %117, %120 : vector<16x1xf32>
    %122 = math.rsqrt %121 : vector<16x1xf32>
    %123 = vector.broadcast %122 : vector<16x1xf32> to vector<16x8xf32>
    %124 = arith.mulf %119, %123 : vector<16x8xf32>
    %c2_68 = arith.constant 2 : index
    %c0_69 = arith.constant 0 : index
    %c0_70 = arith.constant 0 : index
    %125 = vector.load %arg4[%c2_68, %c0_69, %c0_70] : memref<4x1x8xf32, #tpu.memory_space<vmem>>, vector<1x1x8xf32>
    %126 = vector.shape_cast %125 : vector<1x1x8xf32> to vector<1x8xf32>
    %127 = vector.broadcast %126 : vector<1x8xf32> to vector<16x8xf32>
    %128 = arith.mulf %124, %127 : vector<16x8xf32>
    %c2_71 = arith.constant 2 : index
    %c0_72 = arith.constant 0 : index
    %c0_73 = arith.constant 0 : index
    %129 = vector.load %arg5[%c2_71, %c0_72, %c0_73] : memref<4x1x8xf32, #tpu.memory_space<vmem>>, vector<1x1x8xf32>
    %130 = vector.shape_cast %129 : vector<1x1x8xf32> to vector<1x8xf32>
    %131 = vector.broadcast %130 : vector<1x8xf32> to vector<16x8xf32>
    %132 = arith.addf %128, %131 : vector<16x8xf32>
    %c2_74 = arith.constant 2 : index
    %c0_75 = arith.constant 0 : index
    %c0_76 = arith.constant 0 : index
    %133 = vector.load %arg15[%c2_74, %c0_75, %c0_76] : memref<4x16x8xf32, #tpu.memory_space<vmem>>, vector<1x16x8xf32>
    %134 = vector.shape_cast %133 : vector<1x16x8xf32> to vector<16x8xf32>
    %135 = vector.shape_cast %132 : vector<16x8xf32> to vector<1x16x8xf32>
    tpu.vector_store %arg15[%c2_74, %c0_75, %c0_76], %135 {strides = array<i32>} : memref<4x16x8xf32, #tpu.memory_space<vmem>>, vector<1x16x8xf32>,
    %136 = arith.mulf %132, %132 : vector<16x8xf32>
    %cst_77 = arith.constant dense<0.000000e+00> : vector<16xf32>
    %137 = vector.multi_reduction <add>, %136, %cst_77 [1] : vector<16x8xf32> to vector<16xf32>
    %138 = vector.shape_cast %137 : vector<16xf32> to vector<16x1xf32>
    %139 = math.sqrt %138 : vector<16x1xf32>
    %cst_78 = arith.constant 9.99999993E-9 : f32
    %140 = vector.broadcast %cst_78 : f32 to vector<16x1xf32>
    %141 = arith.addf %139, %140 : vector<16x1xf32>
    %cst_79 = arith.constant 1.000000e+00 : f32
    %142 = vector.broadcast %cst_79 : f32 to vector<16x1xf32>
    %143 = arith.divf %142, %141 : vector<16x1xf32>
    %c3 = arith.constant 3 : index
    %c0_80 = arith.constant 0 : index
    %c0_81 = arith.constant 0 : index
    %144 = vector.load %arg1[%c3, %c0_80, %c0_81] : memref<4x16x32xf32, #tpu.memory_space<vmem>>, vector<1x16x32xf32>
    %145 = vector.shape_cast %144 : vector<1x16x32xf32> to vector<16x32xf32>
    %c3_82 = arith.constant 3 : index
    %c0_83 = arith.constant 0 : index
    %c0_84 = arith.constant 0 : index
    %146 = vector.load %arg2[%c3_82, %c0_83, %c0_84] : memref<4x32x8xf32, #tpu.memory_space<vmem>>, vector<1x32x8xf32>
    %147 = vector.shape_cast %146 : vector<1x32x8xf32> to vector<32x8xf32>
    %cst_85 = arith.constant dense<0.000000e+00> : vector<16x8xf32>
    %148 = tpu.matmul %145, %147, %cst_85 {dimension_numbers = #tpu.dot_dimension_numbers<[1], [0], [0], [1], [0, 0, 1, 1], [], []>} : vector<16x32xf32>, vector<32x8xf32>, vector<16x8xf32> -> vector<16x8xf32>
    %c3_86 = arith.constant 3 : index
    %c0_87 = arith.constant 0 : index
    %c0_88 = arith.constant 0 : index
    %149 = vector.load %arg3[%c3_86, %c0_87, %c0_88] : memref<4x1x8xf32, #tpu.memory_space<vmem>>, vector<1x1x8xf32>
    %150 = vector.shape_cast %149 : vector<1x1x8xf32> to vector<1x8xf32>
    %151 = vector.broadcast %150 : vector<1x8xf32> to vector<16x8xf32>
    %152 = arith.addf %148, %151 : vector<16x8xf32>
    %cst_89 = arith.constant dense<0.000000e+00> : vector<16xf32>
    %153 = vector.multi_reduction <add>, %152, %cst_89 [1] : vector<16x8xf32> to vector<16xf32>
    %154 = vector.shape_cast %153 : vector<16xf32> to vector<16x1xf32>
    %cst_90 = arith.constant 8.000000e+00 : f32
    %155 = vector.broadcast %cst_90 : f32 to vector<16x1xf32>
    %156 = arith.divf %154, %155 : vector<16x1xf32>
    %157 = arith.mulf %152, %152 : vector<16x8xf32>
    %cst_91 = arith.constant dense<0.000000e+00> : vector<16xf32>
    %158 = vector.multi_reduction <add>, %157, %cst_91 [1] : vector<16x8xf32> to vector<16xf32>
    %159 = vector.shape_cast %158 : vector<16xf32> to vector<16x1xf32>
    %cst_92 = arith.constant 8.000000e+00 : f32
    %160 = vector.broadcast %cst_92 : f32 to vector<16x1xf32>
    %161 = arith.divf %159, %160 : vector<16x1xf32>
    %162 = arith.mulf %156, %156 : vector<16x1xf32>
    %163 = arith.subf %161, %162 : vector<16x1xf32>
    %cst_93 = arith.constant 0.000000e+00 : f32
    %164 = vector.broadcast %cst_93 : f32 to vector<16x1xf32>
    %165 = arith.maximumf %163, %164 : vector<16x1xf32>
    %166 = vector.broadcast %156 : vector<16x1xf32> to vector<16x8xf32>
    %167 = arith.subf %152, %166 : vector<16x8xf32>
    %cst_94 = arith.constant 9.99999974E-6 : f32
    %168 = vector.broadcast %cst_94 : f32 to vector<16x1xf32>
    %169 = arith.addf %165, %168 : vector<16x1xf32>
    %170 = math.rsqrt %169 : vector<16x1xf32>
    %171 = vector.broadcast %170 : vector<16x1xf32> to vector<16x8xf32>
    %172 = arith.mulf %167, %171 : vector<16x8xf32>
    %c3_95 = arith.constant 3 : index
    %c0_96 = arith.constant 0 : index
    %c0_97 = arith.constant 0 : index
    %173 = vector.load %arg4[%c3_95, %c0_96, %c0_97] : memref<4x1x8xf32, #tpu.memory_space<vmem>>, vector<1x1x8xf32>
    %174 = vector.shape_cast %173 : vector<1x1x8xf32> to vector<1x8xf32>
    %175 = vector.broadcast %174 : vector<1x8xf32> to vector<16x8xf32>
    %176 = arith.mulf %172, %175 : vector<16x8xf32>
    %c3_98 = arith.constant 3 : index
    %c0_99 = arith.constant 0 : index
    %c0_100 = arith.constant 0 : index
    %177 = vector.load %arg5[%c3_98, %c0_99, %c0_100] : memref<4x1x8xf32, #tpu.memory_space<vmem>>, vector<1x1x8xf32>
    %178 = vector.shape_cast %177 : vector<1x1x8xf32> to vector<1x8xf32>
    %179 = vector.broadcast %178 : vector<1x8xf32> to vector<16x8xf32>
    %180 = arith.addf %176, %179 : vector<16x8xf32>
    %c3_101 = arith.constant 3 : index
    %c0_102 = arith.constant 0 : index
    %c0_103 = arith.constant 0 : index
    %181 = vector.load %arg15[%c3_101, %c0_102, %c0_103] : memref<4x16x8xf32, #tpu.memory_space<vmem>>, vector<1x16x8xf32>
    %182 = vector.shape_cast %181 : vector<1x16x8xf32> to vector<16x8xf32>
    %183 = vector.shape_cast %180 : vector<16x8xf32> to vector<1x16x8xf32>
    tpu.vector_store %arg15[%c3_101, %c0_102, %c0_103], %183 {strides = array<i32>} : memref<4x16x8xf32, #tpu.memory_space<vmem>>, vector<1x16x8xf32>,
    %c3_104 = arith.constant 3 : index
    %c0_105 = arith.constant 0 : index
    %c0_106 = arith.constant 0 : index
    %184 = vector.load %arg15[%c3_104, %c0_105, %c0_106] : memref<4x16x8xf32, #tpu.memory_space<vmem>>, vector<1x16x8xf32>
    %185 = vector.shape_cast %184 : vector<1x16x8xf32> to vector<16x8xf32>
    %c0_107 = arith.constant 0 : index
    %c0_108 = arith.constant 0 : index
    %c0_109 = arith.constant 0 : index
    %186 = vector.load %arg15[%c0_107, %c0_108, %c0_109] : memref<4x16x8xf32, #tpu.memory_space<vmem>>, vector<1x16x8xf32>
    %187 = vector.shape_cast %186 : vector<1x16x8xf32> to vector<16x8xf32>
    %188 = arith.mulf %187, %187 : vector<16x8xf32>
    %cst_110 = arith.constant dense<0.000000e+00> : vector<16xf32>
    %189 = vector.multi_reduction <add>, %188, %cst_110 [1] : vector<16x8xf32> to vector<16xf32>
    %190 = vector.shape_cast %189 : vector<16xf32> to vector<16x1xf32>
    %191 = arith.mulf %47, %47 : vector<16x1xf32>
    %192 = arith.mulf %190, %191 : vector<16x1xf32>
    %cst_111 = arith.constant 0.000000e+00 : f32
    %193 = vector.broadcast %cst_111 : f32 to vector<16x1xf32>
    %194 = arith.maximumf %192, %193 : vector<16x1xf32>
    %c1_112 = arith.constant 1 : index
    %c0_113 = arith.constant 0 : index
    %c0_114 = arith.constant 0 : index
    %195 = vector.load %arg15[%c1_112, %c0_113, %c0_114] : memref<4x16x8xf32, #tpu.memory_space<vmem>>, vector<1x16x8xf32>
    %196 = vector.shape_cast %195 : vector<1x16x8xf32> to vector<16x8xf32>
    %197 = arith.mulf %187, %196 : vector<16x8xf32>
    %cst_115 = arith.constant dense<0.000000e+00> : vector<16xf32>
    %198 = vector.multi_reduction <add>, %197, %cst_115 [1] : vector<16x8xf32> to vector<16xf32>
    %199 = vector.shape_cast %198 : vector<16xf32> to vector<16x1xf32>
    %200 = arith.mulf %47, %95 : vector<16x1xf32>
    %201 = arith.mulf %199, %200 : vector<16x1xf32>
    %cst_116 = arith.constant 0.000000e+00 : f32
    %202 = vector.broadcast %cst_116 : f32 to vector<16x1xf32>
    %203 = arith.maximumf %201, %202 : vector<16x1xf32>
    %204 = arith.addf %194, %203 : vector<16x1xf32>
    %c2_117 = arith.constant 2 : index
    %c0_118 = arith.constant 0 : index
    %c0_119 = arith.constant 0 : index
    %205 = vector.load %arg15[%c2_117, %c0_118, %c0_119] : memref<4x16x8xf32, #tpu.memory_space<vmem>>, vector<1x16x8xf32>
    %206 = vector.shape_cast %205 : vector<1x16x8xf32> to vector<16x8xf32>
    %207 = arith.mulf %187, %206 : vector<16x8xf32>
    %cst_120 = arith.constant dense<0.000000e+00> : vector<16xf32>
    %208 = vector.multi_reduction <add>, %207, %cst_120 [1] : vector<16x8xf32> to vector<16xf32>
    %209 = vector.shape_cast %208 : vector<16xf32> to vector<16x1xf32>
    %210 = arith.mulf %47, %143 : vector<16x1xf32>
    %211 = arith.mulf %209, %210 : vector<16x1xf32>
    %cst_121 = arith.constant 0.000000e+00 : f32
    %212 = vector.broadcast %cst_121 : f32 to vector<16x1xf32>
    %213 = arith.maximumf %211, %212 : vector<16x1xf32>
    %214 = arith.addf %204, %213 : vector<16x1xf32>
    %c1_122 = arith.constant 1 : index
    %c0_123 = arith.constant 0 : index
    %c0_124 = arith.constant 0 : index
    %215 = vector.load %arg15[%c1_122, %c0_123, %c0_124] : memref<4x16x8xf32, #tpu.memory_space<vmem>>, vector<1x16x8xf32>
    %216 = vector.shape_cast %215 : vector<1x16x8xf32> to vector<16x8xf32>
    %217 = arith.mulf %216, %216 : vector<16x8xf32>
    %cst_125 = arith.constant dense<0.000000e+00> : vector<16xf32>
    %218 = vector.multi_reduction <add>, %217, %cst_125 [1] : vector<16x8xf32> to vector<16xf32>
    %219 = vector.shape_cast %218 : vector<16xf32> to vector<16x1xf32>
    %220 = arith.mulf %95, %95 : vector<16x1xf32>
    %221 = arith.mulf %219, %220 : vector<16x1xf32>
    %cst_126 = arith.constant 0.000000e+00 : f32
    %222 = vector.broadcast %cst_126 : f32 to vector<16x1xf32>
    %223 = arith.maximumf %221, %222 : vector<16x1xf32>
    %224 = arith.addf %203, %223 : vector<16x1xf32>
    %c2_127 = arith.constant 2 : index
    %c0_128 = arith.constant 0 : index
    %c0_129 = arith.constant 0 : index
    %225 = vector.load %arg15[%c2_127, %c0_128, %c0_129] : memref<4x16x8xf32, #tpu.memory_space<vmem>>, vector<1x16x8xf32>
    %226 = vector.shape_cast %225 : vector<1x16x8xf32> to vector<16x8xf32>
    %227 = arith.mulf %216, %226 : vector<16x8xf32>
    %cst_130 = arith.constant dense<0.000000e+00> : vector<16xf32>
    %228 = vector.multi_reduction <add>, %227, %cst_130 [1] : vector<16x8xf32> to vector<16xf32>
    %229 = vector.shape_cast %228 : vector<16xf32> to vector<16x1xf32>
    %230 = arith.mulf %95, %143 : vector<16x1xf32>
    %231 = arith.mulf %229, %230 : vector<16x1xf32>
    %cst_131 = arith.constant 0.000000e+00 : f32
    %232 = vector.broadcast %cst_131 : f32 to vector<16x1xf32>
    %233 = arith.maximumf %231, %232 : vector<16x1xf32>
    %234 = arith.addf %224, %233 : vector<16x1xf32>
    %235 = arith.addf %213, %233 : vector<16x1xf32>
    %c2_132 = arith.constant 2 : index
    %c0_133 = arith.constant 0 : index
    %c0_134 = arith.constant 0 : index
    %236 = vector.load %arg15[%c2_132, %c0_133, %c0_134] : memref<4x16x8xf32, #tpu.memory_space<vmem>>, vector<1x16x8xf32>
    %237 = vector.shape_cast %236 : vector<1x16x8xf32> to vector<16x8xf32>
    %238 = arith.mulf %237, %237 : vector<16x8xf32>
    %cst_135 = arith.constant dense<0.000000e+00> : vector<16xf32>
    %239 = vector.multi_reduction <add>, %238, %cst_135 [1] : vector<16x8xf32> to vector<16xf32>
    %240 = vector.shape_cast %239 : vector<16xf32> to vector<16x1xf32>
    %241 = arith.mulf %143, %143 : vector<16x1xf32>
    %242 = arith.mulf %240, %241 : vector<16x1xf32>
    %cst_136 = arith.constant 0.000000e+00 : f32
    %243 = vector.broadcast %cst_136 : f32 to vector<16x1xf32>
    %244 = arith.maximumf %242, %243 : vector<16x1xf32>
    %245 = arith.addf %235, %244 : vector<16x1xf32>
    %c0_137 = arith.constant 0 : index
    %c0_138 = arith.constant 0 : index
    %246 = vector.load %arg6[%c0_137, %c0_138] : memref<1x8xf32, #tpu.memory_space<vmem>>, vector<1x8xf32>
    %c0_139 = arith.constant 0 : index
    %c0_140 = arith.constant 0 : index
    %247 = vector.load %arg7[%c0_139, %c0_140] : memref<1x1xf32, #tpu.memory_space<vmem>>, vector<1x1xf32>
    %248 = vector.broadcast %246 : vector<1x8xf32> to vector<16x8xf32>
    %249 = arith.mulf %185, %248 : vector<16x8xf32>
    %c0_141 = arith.constant 0 : index
    %c0_142 = arith.constant 0 : index
    %c0_143 = arith.constant 0 : index
    %250 = vector.load %arg15[%c0_141, %c0_142, %c0_143] : memref<4x16x8xf32, #tpu.memory_space<vmem>>, vector<1x16x8xf32>
    %251 = vector.shape_cast %250 : vector<1x16x8xf32> to vector<16x8xf32>
    %252 = arith.mulf %251, %249 : vector<16x8xf32>
    %cst_144 = arith.constant dense<0.000000e+00> : vector<16xf32>
    %253 = vector.multi_reduction <add>, %252, %cst_144 [1] : vector<16x8xf32> to vector<16xf32>
    %254 = vector.shape_cast %253 : vector<16xf32> to vector<16x1xf32>
    %255 = vector.broadcast %247 : vector<1x1xf32> to vector<16x1xf32>
    %256 = arith.addf %254, %255 : vector<16x1xf32>
    %cst_145 = arith.constant 0.000000e+00 : f32
    %257 = vector.broadcast %cst_145 : f32 to vector<16x1xf32>
    %258 = arith.maximumf %256, %257 : vector<16x1xf32>
    %259 = arith.divf %258, %214 : vector<16x1xf32>
    %c1_146 = arith.constant 1 : index
    %c0_147 = arith.constant 0 : index
    %c0_148 = arith.constant 0 : index
    %260 = vector.load %arg15[%c1_146, %c0_147, %c0_148] : memref<4x16x8xf32, #tpu.memory_space<vmem>>, vector<1x16x8xf32>
    %261 = vector.shape_cast %260 : vector<1x16x8xf32> to vector<16x8xf32>
    %262 = arith.mulf %261, %249 : vector<16x8xf32>
    %cst_149 = arith.constant dense<0.000000e+00> : vector<16xf32>
    %263 = vector.multi_reduction <add>, %262, %cst_149 [1] : vector<16x8xf32> to vector<16xf32>
    %264 = vector.shape_cast %263 : vector<16xf32> to vector<16x1xf32>
    %265 = vector.broadcast %247 : vector<1x1xf32> to vector<16x1xf32>
    %266 = arith.addf %264, %265 : vector<16x1xf32>
    %cst_150 = arith.constant 0.000000e+00 : f32
    %267 = vector.broadcast %cst_150 : f32 to vector<16x1xf32>
    %268 = arith.maximumf %266, %267 : vector<16x1xf32>
    %269 = arith.divf %268, %234 : vector<16x1xf32>
    %c2_151 = arith.constant 2 : index
    %c0_152 = arith.constant 0 : index
    %c0_153 = arith.constant 0 : index
    %270 = vector.load %arg15[%c2_151, %c0_152, %c0_153] : memref<4x16x8xf32, #tpu.memory_space<vmem>>, vector<1x16x8xf32>
    %271 = vector.shape_cast %270 : vector<1x16x8xf32> to vector<16x8xf32>
    %272 = arith.mulf %271, %249 : vector<16x8xf32>
    %cst_154 = arith.constant dense<0.000000e+00> : vector<16xf32>
    %273 = vector.multi_reduction <add>, %272, %cst_154 [1] : vector<16x8xf32> to vector<16xf32>
    %274 = vector.shape_cast %273 : vector<16xf32> to vector<16x1xf32>
    %275 = vector.broadcast %247 : vector<1x1xf32> to vector<16x1xf32>
    %276 = arith.addf %274, %275 : vector<16x1xf32>
    %cst_155 = arith.constant 0.000000e+00 : f32
    %277 = vector.broadcast %cst_155 : f32 to vector<16x1xf32>
    %278 = arith.maximumf %276, %277 : vector<16x1xf32>
    %279 = arith.divf %278, %245 : vector<16x1xf32>
    %280 = arith.addf %259, %269 : vector<16x1xf32>
    %281 = arith.addf %280, %279 : vector<16x1xf32>
    %cst_156 = arith.constant 9.99999993E-9 : f32
    %282 = vector.broadcast %cst_156 : f32 to vector<16x1xf32>
    %283 = arith.addf %281, %282 : vector<16x1xf32>
    %cst_157 = arith.constant 1.000000e+00 : f32
    %284 = vector.broadcast %cst_157 : f32 to vector<16x1xf32>
    %285 = arith.divf %284, %283 : vector<16x1xf32>
    %286 = arith.mulf %259, %285 : vector<16x1xf32>
    %c0_158 = arith.constant 0 : index
    %c0_159 = arith.constant 0 : index
    %c0_160 = arith.constant 0 : index
    %287 = vector.load %arg15[%c0_158, %c0_159, %c0_160] : memref<4x16x8xf32, #tpu.memory_space<vmem>>, vector<1x16x8xf32>
    %288 = vector.shape_cast %287 : vector<1x16x8xf32> to vector<16x8xf32>
    %289 = vector.broadcast %286 : vector<16x1xf32> to vector<16x8xf32>
    %290 = arith.mulf %289, %288 : vector<16x8xf32>
    %291 = arith.addf %185, %290 : vector<16x8xf32>
    %292 = arith.mulf %269, %285 : vector<16x1xf32>
    %c1_161 = arith.constant 1 : index
    %c0_162 = arith.constant 0 : index
    %c0_163 = arith.constant 0 : index
    %293 = vector.load %arg15[%c1_161, %c0_162, %c0_163] : memref<4x16x8xf32, #tpu.memory_space<vmem>>, vector<1x16x8xf32>
    %294 = vector.shape_cast %293 : vector<1x16x8xf32> to vector<16x8xf32>
    %295 = vector.broadcast %292 : vector<16x1xf32> to vector<16x8xf32>
    %296 = arith.mulf %295, %294 : vector<16x8xf32>
    %297 = arith.addf %291, %296 : vector<16x8xf32>
    %298 = arith.mulf %279, %285 : vector<16x1xf32>
    %c2_164 = arith.constant 2 : index
    %c0_165 = arith.constant 0 : index
    %c0_166 = arith.constant 0 : index
    %299 = vector.load %arg15[%c2_164, %c0_165, %c0_166] : memref<4x16x8xf32, #tpu.memory_space<vmem>>, vector<1x16x8xf32>
    %300 = vector.shape_cast %299 : vector<1x16x8xf32> to vector<16x8xf32>
    %301 = vector.broadcast %298 : vector<16x1xf32> to vector<16x8xf32>
    %302 = arith.mulf %301, %300 : vector<16x8xf32>
    %303 = arith.addf %297, %302 : vector<16x8xf32>
    %cst_167 = arith.constant 0.000000e+00 : f32
    %304 = vector.broadcast %cst_167 : f32 to vector<16x8xf32>
    %305 = arith.maximumf %303, %304 : vector<16x8xf32>
    %c0_168 = arith.constant 0 : index
    %c0_169 = arith.constant 0 : index
    %306 = vector.load %arg8[%c0_168, %c0_169] : memref<8x32xf32, #tpu.memory_space<vmem>>, vector<8x32xf32>
    %cst_170 = arith.constant dense<0.000000e+00> : vector<16x32xf32>
    %307 = tpu.matmul %305, %306, %cst_170 {dimension_numbers = #tpu.dot_dimension_numbers<[1], [0], [0], [1], [0, 0, 1, 1], [], []>} : vector<16x8xf32>, vector<8x32xf32>, vector<16x32xf32> -> vector<16x32xf32>
    %c0_171 = arith.constant 0 : index
    %c0_172 = arith.constant 0 : index
    %308 = vector.load %arg9[%c0_171, %c0_172] : memref<1x32xf32, #tpu.memory_space<vmem>>, vector<1x32xf32>
    %309 = vector.broadcast %308 : vector<1x32xf32> to vector<16x32xf32>
    %310 = arith.addf %307, %309 : vector<16x32xf32>
    %cst_173 = arith.constant dense<0.000000e+00> : vector<16xf32>
    %311 = vector.multi_reduction <add>, %310, %cst_173 [1] : vector<16x32xf32> to vector<16xf32>
    %312 = vector.shape_cast %311 : vector<16xf32> to vector<16x1xf32>
    %cst_174 = arith.constant 3.200000e+01 : f32
    %313 = vector.broadcast %cst_174 : f32 to vector<16x1xf32>
    %314 = arith.divf %312, %313 : vector<16x1xf32>
    %315 = arith.mulf %310, %310 : vector<16x32xf32>
    %cst_175 = arith.constant dense<0.000000e+00> : vector<16xf32>
    %316 = vector.multi_reduction <add>, %315, %cst_175 [1] : vector<16x32xf32> to vector<16xf32>
    %317 = vector.shape_cast %316 : vector<16xf32> to vector<16x1xf32>
    %cst_176 = arith.constant 3.200000e+01 : f32
    %318 = vector.broadcast %cst_176 : f32 to vector<16x1xf32>
    %319 = arith.divf %317, %318 : vector<16x1xf32>
    %320 = arith.mulf %314, %314 : vector<16x1xf32>
    %321 = arith.subf %319, %320 : vector<16x1xf32>
    %cst_177 = arith.constant 0.000000e+00 : f32
    %322 = vector.broadcast %cst_177 : f32 to vector<16x1xf32>
    %323 = arith.maximumf %321, %322 : vector<16x1xf32>
    %324 = vector.broadcast %314 : vector<16x1xf32> to vector<16x32xf32>
    %325 = arith.subf %310, %324 : vector<16x32xf32>
    %cst_178 = arith.constant 9.99999996E-13 : f32
    %326 = vector.broadcast %cst_178 : f32 to vector<16x1xf32>
    %327 = arith.addf %323, %326 : vector<16x1xf32>
    %328 = math.rsqrt %327 : vector<16x1xf32>
    %329 = vector.broadcast %328 : vector<16x1xf32> to vector<16x32xf32>
    %330 = arith.mulf %325, %329 : vector<16x32xf32>
    %c0_179 = arith.constant 0 : index
    %c0_180 = arith.constant 0 : index
    %331 = vector.load %arg10[%c0_179, %c0_180] : memref<1x32xf32, #tpu.memory_space<vmem>>, vector<1x32xf32>
    %332 = vector.broadcast %331 : vector<1x32xf32> to vector<16x32xf32>
    %333 = arith.mulf %330, %332 : vector<16x32xf32>
    %c0_181 = arith.constant 0 : index
    %c0_182 = arith.constant 0 : index
    %334 = vector.load %arg11[%c0_181, %c0_182] : memref<1x32xf32, #tpu.memory_space<vmem>>, vector<1x32xf32>
    %335 = vector.broadcast %334 : vector<1x32xf32> to vector<16x32xf32>
    %336 = arith.addf %333, %335 : vector<16x32xf32>
    %c0_183 = arith.constant 0 : index
    %c0_184 = arith.constant 0 : index
    %337 = vector.load %arg13[%c0_183, %c0_184] : memref<1x1xf32, #tpu.memory_space<vmem>>, vector<1x1xf32>
    %c0_185 = arith.constant 0 : index
    %c0_186 = arith.constant 0 : index
    %338 = vector.load %arg12[%c0_185, %c0_186] : memref<16x32xf32, #tpu.memory_space<vmem>>, vector<16x32xf32>
    %339 = vector.broadcast %337 : vector<1x1xf32> to vector<16x32xf32>
    %340 = arith.mulf %339, %338 : vector<16x32xf32>
    %341 = arith.addf %336, %340 : vector<16x32xf32>
    %c0_187 = arith.constant 0 : index
    %c0_188 = arith.constant 0 : index
    %342 = vector.load %arg14[%c0_187, %c0_188] : memref<16x32xf32, #tpu.memory_space<vmem>>, vector<16x32xf32>
    tpu.vector_store %arg14[%c0_187, %c0_188], %341 {strides = array<i32>} : memref<16x32xf32, #tpu.memory_space<vmem>>, vector<16x32xf32>,
    return
  }
  func.func @transform_0(%arg0: i32) -> (i32, i32, i32) {
    %c0_i32 = arith.constant 0 : i32
    %c0_i32_0 = arith.constant 0 : i32
    %c0_i32_1 = arith.constant 0 : i32
    return %c0_i32, %arg0, %c0_i32_0 : i32, i32, i32
  }
  func.func @transform_1(%arg0: i32) -> (i32, i32, i32) {
    %c0_i32 = arith.constant 0 : i32
    %c0_i32_0 = arith.constant 0 : i32
    %c0_i32_1 = arith.constant 0 : i32
    %c0_i32_2 = arith.constant 0 : i32
    return %c0_i32, %c0_i32_0, %c0_i32_1 : i32, i32, i32
  }
  func.func @transform_2(%arg0: i32) -> (i32, i32, i32) {
    %c0_i32 = arith.constant 0 : i32
    %c0_i32_0 = arith.constant 0 : i32
    %c0_i32_1 = arith.constant 0 : i32
    %c0_i32_2 = arith.constant 0 : i32
    return %c0_i32, %c0_i32_0, %c0_i32_1 : i32, i32, i32
  }
  func.func @transform_3(%arg0: i32) -> (i32, i32, i32) {
    %c0_i32 = arith.constant 0 : i32
    %c0_i32_0 = arith.constant 0 : i32
    %c0_i32_1 = arith.constant 0 : i32
    %c0_i32_2 = arith.constant 0 : i32
    return %c0_i32, %c0_i32_0, %c0_i32_1 : i32, i32, i32
  }
  func.func @transform_4(%arg0: i32) -> (i32, i32, i32) {
    %c0_i32 = arith.constant 0 : i32
    %c0_i32_0 = arith.constant 0 : i32
    %c0_i32_1 = arith.constant 0 : i32
    %c0_i32_2 = arith.constant 0 : i32
    return %c0_i32, %c0_i32_0, %c0_i32_1 : i32, i32, i32
  }
  func.func @transform_5(%arg0: i32) -> (i32, i32) {
    %c0_i32 = arith.constant 0 : i32
    %c0_i32_0 = arith.constant 0 : i32
    %c0_i32_1 = arith.constant 0 : i32
    return %c0_i32, %c0_i32_0 : i32, i32
  }
  func.func @transform_6(%arg0: i32) -> (i32, i32) {
    %c0_i32 = arith.constant 0 : i32
    %c0_i32_0 = arith.constant 0 : i32
    %c0_i32_1 = arith.constant 0 : i32
    return %c0_i32, %c0_i32_0 : i32, i32
  }
  func.func @transform_7(%arg0: i32) -> (i32, i32) {
    %c0_i32 = arith.constant 0 : i32
    %c0_i32_0 = arith.constant 0 : i32
    %c0_i32_1 = arith.constant 0 : i32
    return %c0_i32, %c0_i32_0 : i32, i32
  }
  func.func @transform_8(%arg0: i32) -> (i32, i32) {
    %c0_i32 = arith.constant 0 : i32
    %c0_i32_0 = arith.constant 0 : i32
    %c0_i32_1 = arith.constant 0 : i32
    return %c0_i32, %c0_i32_0 : i32, i32
  }
  func.func @transform_9(%arg0: i32) -> (i32, i32) {
    %c0_i32 = arith.constant 0 : i32
    %c0_i32_0 = arith.constant 0 : i32
    %c0_i32_1 = arith.constant 0 : i32
    return %c0_i32, %c0_i32_0 : i32, i32
  }
  func.func @transform_10(%arg0: i32) -> (i32, i32) {
    %c0_i32 = arith.constant 0 : i32
    %c0_i32_0 = arith.constant 0 : i32
    %c0_i32_1 = arith.constant 0 : i32
    return %c0_i32, %c0_i32_0 : i32, i32
  }
  func.func @transform_11(%arg0: i32) -> (i32, i32) {
    %c0_i32 = arith.constant 0 : i32
    %c0_i32_0 = arith.constant 0 : i32
    return %arg0, %c0_i32 : i32, i32
  }
  func.func @transform_12(%arg0: i32) -> (i32, i32) {
    %c0_i32 = arith.constant 0 : i32
    %c0_i32_0 = arith.constant 0 : i32
    %c0_i32_1 = arith.constant 0 : i32
    return %c0_i32, %c0_i32_0 : i32, i32
  }
  func.func @transform_13(%arg0: i32) -> (i32, i32) {
    %c0_i32 = arith.constant 0 : i32
    %c0_i32_0 = arith.constant 0 : i32
    return %arg0, %c0_i32 : i32, i32
  }
}

</mosaic_0001>

<llo_original>
// kernel: tpu_custom_call.1
$region0: #{tpu_custom_call.1}
  #allocation0 [shape = 'u32[]', space=smem, size = 0x4, offset = 0x4, fixed_abs, tag = 'smem constant byte address 0x4 - core index']
  #allocation1 [shape = 'u32[72,128]{1,0:T(1,128)}', space=vmem, size = 0x9000, scoped, tag = 'internal scratch']
  #allocation2 [shape = 'f32[4,16,8]{2,1,0:T(8,128)}', space=vmem, size = 0x8000, scoped, tag = 'scratch operand']
  #allocation3 [shape = 'f32[1,1]{1,0:T(1,128)S(1)}', space=vmem, size = 0x200, scoped, tag = 'scoped memory for tpu_custom_call.1']
  #allocation4 [shape = 'f32[1,1]{1,0:T(1,128)S(1)}', space=vmem, size = 0x200, scoped, tag = 'scoped memory for tpu_custom_call.1']
  %s0 = inlined_call_operand.vmem [shape: f32[4,16,32], index: 0, kind: input, shape index: {}]
  %s1 = inlined_call_operand.vmem [shape: f32[4,32,8], index: 1, kind: input, shape index: {}]
  %s2 = inlined_call_operand.vmem [shape: f32[4,1,8], index: 2, kind: input, shape index: {}]
  %s3 = inlined_call_operand.vmem [shape: f32[4,1,8], index: 3, kind: input, shape index: {}]
  %s4 = inlined_call_operand.vmem [shape: f32[4,1,8], index: 4, kind: input, shape index: {}]
  %s5 = inlined_call_operand.vmem [shape: f32[1,8], index: 5, kind: input, shape index: {}]
  %s6 = inlined_call_operand.<no memory space> [shape: f32[1,1], index: 6, kind: input, shape index: {}]
  %s7 = inlined_call_operand.vmem [shape: f32[8,32], index: 7, kind: input, shape index: {}]
  %s8 = inlined_call_operand.vmem [shape: f32[1,32], index: 8, kind: input, shape index: {}]
  %s9 = inlined_call_operand.vmem [shape: f32[1,32], index: 9, kind: input, shape index: {}]
  %s10 = inlined_call_operand.vmem [shape: f32[1,32], index: 10, kind: input, shape index: {}]
  %s11 = inlined_call_operand.vmem [shape: f32[16,32], index: 11, kind: input, shape index: {}]
  %s12 = inlined_call_operand.<no memory space> [shape: f32[1,1], index: 12, kind: input, shape index: {}]
  %s13 = inlined_call_operand.hbm [shape: f32[16,32], index: 13, kind: output, shape index: {}]
  %s14 = sld [smem:[#allocation0]]
  $region62: #{tpu_custom_call.1} parent=0
    _
  %s16 = ssub.s32 1, %s14
  %s17 = scalar_select 0, %s16, %s14
  %v18 = vstv %s6
  %19 = vst [vmem:[#allocation3] sm:$0x1] %v18
  %v20 = vstv %s12
  %21 = vst [vmem:[#allocation4] sm:$0x1] %v20
  $region1: #{tpu_custom_call.1} parent=0
    #allocation5 [shape = 'u8[8192]{0}', space=vmem, size = 0x2000, scoped, tag = 'output window, operand 0, single buffered']
    #allocation6 [shape = 's32[1]{0}', space=sflag, size = 0x4, scoped, tag = 'scoped memory for tpu_custom_call.1']
    %22 = vsyncpa [#allocation6], 0
    // Predicated region
    $region2: #{tpu_custom_call.1} parent=1 // pred_check
      _
    $region3: #{tpu_custom_call.1} parent=1 // pred_check_branch
      %24 = sbr.rel (0) target = $region5
    $region4: #{tpu_custom_call.1} parent=1 // pred_region
      _
    $region5: #{tpu_custom_call.1} parent=1 // pred_fallthru
      _
    // Predicated region
    $region6: #{tpu_custom_call.1} parent=1 // pred_check
      _
    $region7: #{tpu_custom_call.1} parent=1 // pred_check_branch
      %26 = sbr.rel (0) target = $region9
    $region8: #{tpu_custom_call.1} parent=1 // pred_region
      _
    $region9: #{tpu_custom_call.1} parent=1 // pred_fallthru
      _
    // Predicated region
    $region10: #{tpu_custom_call.1} parent=1 // pred_check
      _
    $region11: #{tpu_custom_call.1} parent=1 // pred_check_branch
      %28 = sbr.rel (0) target = $region13
    $region12: #{tpu_custom_call.1} parent=1 // pred_region
      _
    $region13: #{tpu_custom_call.1} parent=1 // pred_fallthru
      _
    // Predicated region
    $region14: #{tpu_custom_call.1} parent=1 // pred_check
      _
    $region15: #{tpu_custom_call.1} parent=1 // pred_check_branch
      %30 = sbr.rel (0) target = $region17
    $region16: #{tpu_custom_call.1} parent=1 // pred_region
      _
    $region17: #{tpu_custom_call.1} parent=1 // pred_fallthru
      _
    // Predicated region
    $region18: #{tpu_custom_call.1} parent=1 // pred_check
      _
    $region19: #{tpu_custom_call.1} parent=1 // pred_check_branch
      %32 = sbr.rel (0) target = $region21
    $region20: #{tpu_custom_call.1} parent=1 // pred_region
      _
    $region21: #{tpu_custom_call.1} parent=1 // pred_fallthru
      _
    // Predicated region
    $region22: #{tpu_custom_call.1} parent=1 // pred_check
      _
    $region23: #{tpu_custom_call.1} parent=1 // pred_check_branch
      %34 = sbr.rel (0) target = $region25
    $region24: #{tpu_custom_call.1} parent=1 // pred_region
      _
    $region25: #{tpu_custom_call.1} parent=1 // pred_fallthru
      _
    // Predicated region
    $region26: #{tpu_custom_call.1} parent=1 // pred_check
      _
    $region27: #{tpu_custom_call.1} parent=1 // pred_check_branch
      %36 = sbr.rel (0) target = $region29
    $region28: #{tpu_custom_call.1} parent=1 // pred_region
      _
    $region29: #{tpu_custom_call.1} parent=1 // pred_fallthru
      _
    // Predicated region
    $region30: #{tpu_custom_call.1} parent=1 // pred_check
      _
    $region31: #{tpu_custom_call.1} parent=1 // pred_check_branch
      %38 = sbr.rel (0) target = $region33
    $region32: #{tpu_custom_call.1} parent=1 // pred_region
      _
    $region33: #{tpu_custom_call.1} parent=1 // pred_fallthru
      _
    // Predicated region
    $region34: #{tpu_custom_call.1} parent=1 // pred_check
      _
    $region35: #{tpu_custom_call.1} parent=1 // pred_check_branch
      %40 = sbr.rel (0) target = $region37
    $region36: #{tpu_custom_call.1} parent=1 // pred_region
      _
    $region37: #{tpu_custom_call.1} parent=1 // pred_fallthru
      _
    // Predicated region
    $region38: #{tpu_custom_call.1} parent=1 // pred_check
      _
    $region39: #{tpu_custom_call.1} parent=1 // pred_check_branch
      %42 = sbr.rel (0) target = $region41
    $region40: #{tpu_custom_call.1} parent=1 // pred_region
      _
    $region41: #{tpu_custom_call.1} parent=1 // pred_fallthru
      _
    // Predicated region
    $region42: #{tpu_custom_call.1} parent=1 // pred_check
      _
    $region43: #{tpu_custom_call.1} parent=1 // pred_check_branch
      %44 = sbr.rel (0) target = $region45
    $region44: #{tpu_custom_call.1} parent=1 // pred_region
      _
    $region45: #{tpu_custom_call.1} parent=1 // pred_fallthru
      _
    // Predicated region
    $region46: #{tpu_custom_call.1} parent=1 // pred_check
      _
    $region47: #{tpu_custom_call.1} parent=1 // pred_check_branch
      %46 = sbr.rel (0) target = $region49
    $region48: #{tpu_custom_call.1} parent=1 // pred_region
      _
    $region49: #{tpu_custom_call.1} parent=1 // pred_fallthru
      _
    // Predicated region
    $region50: #{tpu_custom_call.1} parent=1 // pred_check
      _
    $region51: #{tpu_custom_call.1} parent=1 // pred_check_branch
      %48 = sbr.rel (0) target = $region53
    $region52: #{tpu_custom_call.1} parent=1 // pred_region
      _
    $region53: #{tpu_custom_call.1} parent=1 // pred_fallthru
      _
    %v49 = vld [vmem:[%s0] sm:$0xff]
    %v50 = vld [vmem:[%s0 + $0x8] sm:$0xff]
    %v51 = vld [vmem:[%s1] sm:$0xff]
    %v52 = vld [vmem:[%s1 + $0x8] sm:$0xff]
    %v53 = vld [vmem:[%s1 + $0x10] sm:$0xff]
    %v54 = vld [vmem:[%s1 + $0x18] sm:$0xff]
    %v55 = vld [vmem:[%s2] sm:$0x1]
    %v57 = vperm.slane %v55, 0
    %vm59 = vcmask 261120
    %v61 = vsel %vm59, %v49, 0
    %v64 = vsel %vm59, %v50, 0
    %66 = vmatpush.msra.mxu0 0.0
    %67 = vmatpush.msra.mxu0 0.0
    %68 = vmatpush.msra.mxu0 0.0
    %69 = vmatpush.msra.mxu0 0.0
    %70 = vmatpush.msra.mxu0 0.0
    %71 = vmatpush.msra.mxu0 0.0
    %72 = vmatpush.msra.mxu0 0.0
    %73 = vmatpush.msra.mxu0 0.0
    %74 = vmatpush.msra.mxu0 0.0
    %75 = vmatpush.msra.mxu0 0.0
    %76 = vmatpush.msra.mxu0 0.0
    %77 = vmatpush.msra.mxu0 0.0
    %78 = vmatpush.msra.mxu0 %v54
    %79 = vmatpush.msra.mxu0 %v53
    %80 = vmatpush.msra.mxu0 %v52
    %81 = vmatpush.msra.mxu0 %v51
    %82 = vmatmul.f32.gmra.mxu0 %v61
    %v83 = vpop.f32.mrf.mxu0
    %v84 = vadd.f32 %v57, %v83
    %85 = vmatmul.f32.gmra.mxu0 %v64
    %v86 = vpop.f32.mrf.mxu0
    %v87 = vadd.f32 %v57, %v86
    %88 = vdwg.mxu0
    %vm89 = vcmask 64512
    %v90 = vsel %vm89, %v84, 0.0
    %91 = vadd.xlane.f32.xlu0 %v90
    %v92 = vpop.xlane.xlu0 %91
    %v93 = vsel %vm89, %v87, 0.0
    %94 = vadd.xlane.f32.xlu0 %v93
    %v95 = vpop.xlane.xlu0 %94
    %v96 = vrcp.pop 8.0
    %v97 = vmul.f32 8.0, %v96
    %v98 = vsub.f32 1.0, %v97
    %v99 = vmul.f32 %v96, %v98
    %v100 = vadd.f32 %v96, %v99
    %vm101 = vweird.f32 %v96
    %v102 = vsel %vm101, %v96, %v100
    %v103 = vmul.f32 %v92, %v102
    %v104 = vmul.f32 %v95, %v102
    %v105 = vmul.f32 %v84, %v84
    %v106 = vmul.f32 %v87, %v87
    %v107 = vsel %vm89, %v105, 0.0
    %108 = vadd.xlane.f32.xlu0 %v107
    %v109 = vpop.xlane.xlu0 %108
    %v110 = vsel %vm89, %v106, 0.0
    %111 = vadd.xlane.f32.xlu0 %v110
    %v112 = vpop.xlane.xlu0 %111
    %v113 = vmul.f32 %v109, %v102
    %v114 = vmul.f32 %v112, %v102
    %v115 = vmul.f32 %v103, %v103
    %v116 = vmul.f32 %v104, %v104
    %v117 = vsub.f32 %v113, %v115
    %v118 = vsub.f32 %v114, %v116
    %v119 = vmax.f32 %v117, 0.0
    %v120 = vmax.f32 %v118, 0.0
    %v121 = vsub.f32 %v84, %v103
    %v122 = vsub.f32 %v87, %v104
    %v123 = vadd.f32 %v119, 1e-05
    %v124 = vadd.f32 %v120, 1e-05
    %v125 = vrsqrt.pop %v123
    %v126 = vmul.f32 %v125, %v123
    %v127 = vmul.f32 %v126, %v125
    %v128 = vmul.f32 0.5, %v127
    %v129 = vsub.f32 1.5, %v128
    %v130 = vmul.f32 %v125, %v129
    %vm131 = vweird.f32 %v123
    %vm132 = vweird.f32 %v125
    %vm133 = vmor %vm131, %vm132
    %v134 = vsel %vm133, %v125, %v130
    %v135 = vrsqrt.pop %v124
    %v136 = vmul.f32 %v135, %v124
    %v137 = vmul.f32 %v136, %v135
    %v138 = vmul.f32 0.5, %v137
    %v139 = vsub.f32 1.5, %v138
    %v140 = vmul.f32 %v135, %v139
    %vm141 = vweird.f32 %v124
    %vm142 = vweird.f32 %v135
    %vm143 = vmor %vm141, %vm142
    %v144 = vsel %vm143, %v135, %v140
    %v145 = vmul.f32 %v121, %v134
    %v146 = vmul.f32 %v122, %v144
    %v147 = vld [vmem:[%s3] sm:$0x1]
    %v149 = vperm.slane %v147, 0
    %v151 = vmul.f32 %v145, %v149
    %v152 = vmul.f32 %v146, %v149
    %v153 = vld [vmem:[%s4] sm:$0x1]
    %v155 = vperm.slane %v153, 0
    %v157 = vadd.f32 %v151, %v155
    %v158 = vadd.f32 %v152, %v155
    %159 = vst.msk [vmem:[#allocation2] sm:$0xff] %vm89, %v157
    %160 = vst.msk [vmem:[#allocation2 + $0x8] sm:$0xff] %vm89, %v158
    %v161 = vmul.f32 %v157, %v157
    %v162 = vmul.f32 %v158, %v158
    %v163 = vsel %vm89, %v161, 0.0
    %164 = vadd.xlane.f32.xlu0 %v163
    %v165 = vpop.xlane.xlu0 %164
    %v166 = vsel %vm89, %v162, 0.0
    %167 = vadd.xlane.f32.xlu0 %v166
    %v168 = vpop.xlane.xlu0 %167
    %v169 = vrsqrt.pop %v165
    %v170 = vmul.f32 %v169, %v165
    %v171 = vmul.f32 %v170, %v169
    %v172 = vmul.f32 0.5, %v171
    %v173 = vsub.f32 1.5, %v172
    %v174 = vmul.f32 %v169, %v173
    %v175 = vmul.f32 %v165, %v174
    %vm176 = vcmp.eq.f32.partialorder %v165, inf
    %v177 = vsel %vm176, %v165, %v175
    %vm178 = vcmp.eq.f32.partialorder %v165, 0.0
    %v179 = vand.u32 %v165, 2147483648
    %v180 = vsel %vm178, %v179, %v177
    %v181 = vrsqrt.pop %v168
    %v182 = vmul.f32 %v181, %v168
    %v183 = vmul.f32 %v182, %v181
    %v184 = vmul.f32 0.5, %v183
    %v185 = vsub.f32 1.5, %v184
    %v186 = vmul.f32 %v181, %v185
    %v187 = vmul.f32 %v168, %v186
    %vm188 = vcmp.eq.f32.partialorder %v168, inf
    %v189 = vsel %vm188, %v168, %v187
    %vm190 = vcmp.eq.f32.partialorder %v168, 0.0
    %v191 = vand.u32 %v168, 2147483648
    %v192 = vsel %vm190, %v191, %v189
    %v193 = vadd.f32 %v180, 1e-08
    %v194 = vadd.f32 %v192, 1e-08
    %v195 = vrcp.pop %v193
    %v196 = vmul.f32 %v193, %v195
    %v197 = vsub.f32 1.0, %v196
    %v198 = vmul.f32 %v195, %v197
    %v199 = vadd.f32 %v195, %v198
    %vm200 = vweird.f32 %v193
    %vm201 = vweird.f32 %v195
    %vm202 = vmor %vm200, %vm201
    %v203 = vsel %vm202, %v195, %v199
    %v204 = vand.u32 2147483647, %v193
    %vm205 = vcmp.eq.f32.partialorder %v204, 8.507059e+37
    %v206 = vand.u32 %v193, 2147483648
    %v207 = vor.u32 1.1754944e-38, %v206
    %v208 = vsel %vm205, %v207, %v203
    %v209 = vmul.f32 1.0, %v208
    %v210 = vrcp.pop %v194
    %v211 = vmul.f32 %v194, %v210
    %v212 = vsub.f32 1.0, %v211
    %v213 = vmul.f32 %v210, %v212
    %v214 = vadd.f32 %v210, %v213
    %vm215 = vweird.f32 %v194
    %vm216 = vweird.f32 %v210
    %vm217 = vmor %vm215, %vm216
    %v218 = vsel %vm217, %v210, %v214
    %v219 = vand.u32 2147483647, %v194
    %vm220 = vcmp.eq.f32.partialorder %v219, 8.507059e+37
    %v221 = vand.u32 %v194, 2147483648
    %v222 = vor.u32 1.1754944e-38, %v221
    %v223 = vsel %vm220, %v222, %v218
    %v224 = vmul.f32 1.0, %v223
    %s225 = scalar_lea.vmem %s0, 16
    %v226 = vld [vmem:[%s225] sm:$0xff]
    %v227 = vld [vmem:[%s225 + $0x8] sm:$0xff]
    %s228 = scalar_lea.vmem %s1, 32
    %v229 = vld [vmem:[%s228] sm:$0xff]
    %v230 = vld [vmem:[%s228 + $0x8] sm:$0xff]
    %v231 = vld [vmem:[%s228 + $0x10] sm:$0xff]
    %v232 = vld [vmem:[%s228 + $0x18] sm:$0xff]
    %s233 = scalar_lea.vmem %s2, 1
    %v234 = vld [vmem:[%s233] sm:$0x1]
    %v236 = vperm.slane %v234, 0
    %v239 = vsel %vm59, %v226, 0
    %v242 = vsel %vm59, %v227, 0
    %244 = vmatpush.msra.mxu0 0.0
    %245 = vmatpush.msra.mxu0 0.0
    %246 = vmatpush.msra.mxu0 0.0
    %247 = vmatpush.msra.mxu0 0.0
    %248 = vmatpush.msra.mxu0 0.0
    %249 = vmatpush.msra.mxu0 0.0
    %250 = vmatpush.msra.mxu0 0.0
    %251 = vmatpush.msra.mxu0 0.0
    %252 = vmatpush.msra.mxu0 0.0
    %253 = vmatpush.msra.mxu0 0.0
    %254 = vmatpush.msra.mxu0 0.0
    %255 = vmatpush.msra.mxu0 0.0
    %256 = vmatpush.msra.mxu0 %v232
    %257 = vmatpush.msra.mxu0 %v231
    %258 = vmatpush.msra.mxu0 %v230
    %259 = vmatpush.msra.mxu0 %v229
    %260 = vmatmul.f32.gmra.mxu0 %v239
    %v261 = vpop.f32.mrf.mxu0
    %v262 = vadd.f32 %v236, %v261
    %263 = vmatmul.f32.gmra.mxu0 %v242
    %v264 = vpop.f32.mrf.mxu0
    %v265 = vadd.f32 %v236, %v264
    %266 = vdwg.mxu0
    %v267 = vsel %vm89, %v262, 0.0
    %268 = vadd.xlane.f32.xlu0 %v267
    %v269 = vpop.xlane.xlu0 %268
    %v270 = vsel %vm89, %v265, 0.0
    %271 = vadd.xlane.f32.xlu0 %v270
    %v272 = vpop.xlane.xlu0 %271
    %v273 = vmul.f32 %v269, %v102
    %v274 = vmul.f32 %v272, %v102
    %v275 = vmul.f32 %v262, %v262
    %v276 = vmul.f32 %v265, %v265
    %v277 = vsel %vm89, %v275, 0.0
    %278 = vadd.xlane.f32.xlu0 %v277
    %v279 = vpop.xlane.xlu0 %278
    %v280 = vsel %vm89, %v276, 0.0
    %281 = vadd.xlane.f32.xlu0 %v280
    %v282 = vpop.xlane.xlu0 %281
    %v283 = vmul.f32 %v279, %v102
    %v284 = vmul.f32 %v282, %v102
    %v285 = vmul.f32 %v273, %v273
    %v286 = vmul.f32 %v274, %v274
    %v287 = vsub.f32 %v283, %v285
    %v288 = vsub.f32 %v284, %v286
    %v289 = vmax.f32 %v287, 0.0
    %v290 = vmax.f32 %v288, 0.0
    %v291 = vsub.f32 %v262, %v273
    %v292 = vsub.f32 %v265, %v274
    %v293 = vadd.f32 %v289, 1e-05
    %v294 = vadd.f32 %v290, 1e-05
    %v295 = vrsqrt.pop %v293
    %v296 = vmul.f32 %v295, %v293
    %v297 = vmul.f32 %v296, %v295
    %v298 = vmul.f32 0.5, %v297
    %v299 = vsub.f32 1.5, %v298
    %v300 = vmul.f32 %v295, %v299
    %vm301 = vweird.f32 %v293
    %vm302 = vweird.f32 %v295
    %vm303 = vmor %vm301, %vm302
    %v304 = vsel %vm303, %v295, %v300
    %v305 = vrsqrt.pop %v294
    %v306 = vmul.f32 %v305, %v294
    %v307 = vmul.f32 %v306, %v305
    %v308 = vmul.f32 0.5, %v307
    %v309 = vsub.f32 1.5, %v308
    %v310 = vmul.f32 %v305, %v309
    %vm311 = vweird.f32 %v294
    %vm312 = vweird.f32 %v305
    %vm313 = vmor %vm311, %vm312
    %v314 = vsel %vm313, %v305, %v310
    %v315 = vmul.f32 %v291, %v304
    %v316 = vmul.f32 %v292, %v314
    %s317 = scalar_lea.vmem %s3, 1
    %v318 = vld [vmem:[%s317] sm:$0x1]
    %v320 = vperm.slane %v318, 0
    %v322 = vmul.f32 %v315, %v320
    %v323 = vmul.f32 %v316, %v320
    %s324 = scalar_lea.vmem %s4, 1
    %v325 = vld [vmem:[%s324] sm:$0x1]
    %v327 = vperm.slane %v325, 0
    %v329 = vadd.f32 %v322, %v327
    %v330 = vadd.f32 %v323, %v327
    %s331 = scalar_lea.vmem [#allocation2], 16
    %332 = vst.msk [vmem:[%s331] sm:$0xff] %vm89, %v329
    %333 = vst.msk [vmem:[%s331 + $0x8] sm:$0xff] %vm89, %v330
    %v334 = vmul.f32 %v329, %v329
    %v335 = vmul.f32 %v330, %v330
    %v336 = vsel %vm89, %v334, 0.0
    %337 = vadd.xlane.f32.xlu0 %v336
    %v338 = vpop.xlane.xlu0 %337
    %v339 = vsel %vm89, %v335, 0.0
    %340 = vadd.xlane.f32.xlu0 %v339
    %v341 = vpop.xlane.xlu0 %340
    %v342 = vrsqrt.pop %v338
    %v343 = vmul.f32 %v342, %v338
    %v344 = vmul.f32 %v343, %v342
    %v345 = vmul.f32 0.5, %v344
    %v346 = vsub.f32 1.5, %v345
    %v347 = vmul.f32 %v342, %v346
    %v348 = vmul.f32 %v338, %v347
    %vm349 = vcmp.eq.f32.partialorder %v338, inf
    %v350 = vsel %vm349, %v338, %v348
    %vm351 = vcmp.eq.f32.partialorder %v338, 0.0
    %v352 = vand.u32 %v338, 2147483648
    %v353 = vsel %vm351, %v352, %v350
    %v354 = vrsqrt.pop %v341
    %v355 = vmul.f32 %v354, %v341
    %v356 = vmul.f32 %v355, %v354
    %v357 = vmul.f32 0.5, %v356
    %v358 = vsub.f32 1.5, %v357
    %v359 = vmul.f32 %v354, %v358
    %v360 = vmul.f32 %v341, %v359
    %vm361 = vcmp.eq.f32.partialorder %v341, inf
    %v362 = vsel %vm361, %v341, %v360
    %vm363 = vcmp.eq.f32.partialorder %v341, 0.0
    %v364 = vand.u32 %v341, 2147483648
    %v365 = vsel %vm363, %v364, %v362
    %v366 = vadd.f32 %v353, 1e-08
    %v367 = vadd.f32 %v365, 1e-08
    %v368 = vrcp.pop %v366
    %v369 = vmul.f32 %v366, %v368
    %v370 = vsub.f32 1.0, %v369
    %v371 = vmul.f32 %v368, %v370
    %v372 = vadd.f32 %v368, %v371
    %vm373 = vweird.f32 %v366
    %vm374 = vweird.f32 %v368
    %vm375 = vmor %vm373, %vm374
    %v376 = vsel %vm375, %v368, %v372
    %v377 = vand.u32 2147483647, %v366
    %vm378 = vcmp.eq.f32.partialorder %v377, 8.507059e+37
    %v379 = vand.u32 %v366, 2147483648
    %v380 = vor.u32 1.1754944e-38, %v379
    %v381 = vsel %vm378, %v380, %v376
    %v382 = vmul.f32 1.0, %v381
    %v383 = vrcp.pop %v367
    %v384 = vmul.f32 %v367, %v383
    %v385 = vsub.f32 1.0, %v384
    %v386 = vmul.f32 %v383, %v385
    %v387 = vadd.f32 %v383, %v386
    %vm388 = vweird.f32 %v367
    %vm389 = vweird.f32 %v383
    %vm390 = vmor %vm388, %vm389
    %v391 = vsel %vm390, %v383, %v387
    %v392 = vand.u32 2147483647, %v367
    %vm393 = vcmp.eq.f32.partialorder %v392, 8.507059e+37
    %v394 = vand.u32 %v367, 2147483648
    %v395 = vor.u32 1.1754944e-38, %v394
    %v396 = vsel %vm393, %v395, %v391
    %v397 = vmul.f32 1.0, %v396
    %s398 = scalar_lea.vmem %s0, 32
    %v399 = vld [vmem:[%s398] sm:$0xff]
    %v400 = vld [vmem:[%s398 + $0x8] sm:$0xff]
    %s401 = scalar_lea.vmem %s1, 64
    %v402 = vld [vmem:[%s401] sm:$0xff]
    %v403 = vld [vmem:[%s401 + $0x8] sm:$0xff]
    %v404 = vld [vmem:[%s401 + $0x10] sm:$0xff]
    %v405 = vld [vmem:[%s401 + $0x18] sm:$0xff]
    %s406 = scalar_lea.vmem %s2, 2
    %v407 = vld [vmem:[%s406] sm:$0x1]
    %v409 = vperm.slane %v407, 0
    %v412 = vsel %vm59, %v399, 0
    %v415 = vsel %vm59, %v400, 0
    %417 = vmatpush.msra.mxu0 0.0
    %418 = vmatpush.msra.mxu0 0.0
    %419 = vmatpush.msra.mxu0 0.0
    %420 = vmatpush.msra.mxu0 0.0
    %421 = vmatpush.msra.mxu0 0.0
    %422 = vmatpush.msra.mxu0 0.0
    %423 = vmatpush.msra.mxu0 0.0
    %424 = vmatpush.msra.mxu0 0.0
    %425 = vmatpush.msra.mxu0 0.0
    %426 = vmatpush.msra.mxu0 0.0
    %427 = vmatpush.msra.mxu0 0.0
    %428 = vmatpush.msra.mxu0 0.0
    %429 = vmatpush.msra.mxu0 %v405
    %430 = vmatpush.msra.mxu0 %v404
    %431 = vmatpush.msra.mxu0 %v403
    %432 = vmatpush.msra.mxu0 %v402
    %433 = vmatmul.f32.gmra.mxu0 %v412
    %v434 = vpop.f32.mrf.mxu0
    %v435 = vadd.f32 %v409, %v434
    %436 = vmatmul.f32.gmra.mxu0 %v415
    %v437 = vpop.f32.mrf.mxu0
    %v438 = vadd.f32 %v409, %v437
    %439 = vdwg.mxu0
    %v440 = vsel %vm89, %v435, 0.0
    %441 = vadd.xlane.f32.xlu0 %v440
    %v442 = vpop.xlane.xlu0 %441
    %v443 = vsel %vm89, %v438, 0.0
    %444 = vadd.xlane.f32.xlu0 %v443
    %v445 = vpop.xlane.xlu0 %444
    %v446 = vmul.f32 %v442, %v102
    %v447 = vmul.f32 %v445, %v102
    %v448 = vmul.f32 %v435, %v435
    %v449 = vmul.f32 %v438, %v438
    %v450 = vsel %vm89, %v448, 0.0
    %451 = vadd.xlane.f32.xlu0 %v450
    %v452 = vpop.xlane.xlu0 %451
    %v453 = vsel %vm89, %v449, 0.0
    %454 = vadd.xlane.f32.xlu0 %v453
    %v455 = vpop.xlane.xlu0 %454
    %v456 = vmul.f32 %v452, %v102
    %v457 = vmul.f32 %v455, %v102
    %v458 = vmul.f32 %v446, %v446
    %v459 = vmul.f32 %v447, %v447
    %v460 = vsub.f32 %v456, %v458
    %v461 = vsub.f32 %v457, %v459
    %v462 = vmax.f32 %v460, 0.0
    %v463 = vmax.f32 %v461, 0.0
    %v464 = vsub.f32 %v435, %v446
    %v465 = vsub.f32 %v438, %v447
    %v466 = vadd.f32 %v462, 1e-05
    %v467 = vadd.f32 %v463, 1e-05
    %v468 = vrsqrt.pop %v466
    %v469 = vmul.f32 %v468, %v466
    %v470 = vmul.f32 %v469, %v468
    %v471 = vmul.f32 0.5, %v470
    %v472 = vsub.f32 1.5, %v471
    %v473 = vmul.f32 %v468, %v472
    %vm474 = vweird.f32 %v466
    %vm475 = vweird.f32 %v468
    %vm476 = vmor %vm474, %vm475
    %v477 = vsel %vm476, %v468, %v473
    %v478 = vrsqrt.pop %v467
    %v479 = vmul.f32 %v478, %v467
    %v480 = vmul.f32 %v479, %v478
    %v481 = vmul.f32 0.5, %v480
    %v482 = vsub.f32 1.5, %v481
    %v483 = vmul.f32 %v478, %v482
    %vm484 = vweird.f32 %v467
    %vm485 = vweird.f32 %v478
    %vm486 = vmor %vm484, %vm485
    %v487 = vsel %vm486, %v478, %v483
    %v488 = vmul.f32 %v464, %v477
    %v489 = vmul.f32 %v465, %v487
    %s490 = scalar_lea.vmem %s3, 2
    %v491 = vld [vmem:[%s490] sm:$0x1]
    %v493 = vperm.slane %v491, 0
    %v495 = vmul.f32 %v488, %v493
    %v496 = vmul.f32 %v489, %v493
    %s497 = scalar_lea.vmem %s4, 2
    %v498 = vld [vmem:[%s497] sm:$0x1]
    %v500 = vperm.slane %v498, 0
    %v502 = vadd.f32 %v495, %v500
    %v503 = vadd.f32 %v496, %v500
    %s504 = scalar_lea.vmem [#allocation2], 32
    %505 = vst.msk [vmem:[%s504] sm:$0xff] %vm89, %v502
    %506 = vst.msk [vmem:[%s504 + $0x8] sm:$0xff] %vm89, %v503
    %v507 = vmul.f32 %v502, %v502
    %v508 = vmul.f32 %v503, %v503
    %v509 = vsel %vm89, %v507, 0.0
    %510 = vadd.xlane.f32.xlu0 %v509
    %v511 = vpop.xlane.xlu0 %510
    %v512 = vsel %vm89, %v508, 0.0
    %513 = vadd.xlane.f32.xlu0 %v512
    %v514 = vpop.xlane.xlu0 %513
    %v515 = vrsqrt.pop %v511
    %v516 = vmul.f32 %v515, %v511
    %v517 = vmul.f32 %v516, %v515
    %v518 = vmul.f32 0.5, %v517
    %v519 = vsub.f32 1.5, %v518
    %v520 = vmul.f32 %v515, %v519
    %v521 = vmul.f32 %v511, %v520
    %vm522 = vcmp.eq.f32.partialorder %v511, inf
    %v523 = vsel %vm522, %v511, %v521
    %vm524 = vcmp.eq.f32.partialorder %v511, 0.0
    %v525 = vand.u32 %v511, 2147483648
    %v526 = vsel %vm524, %v525, %v523
    %v527 = vrsqrt.pop %v514
    %v528 = vmul.f32 %v527, %v514
    %v529 = vmul.f32 %v528, %v527
    %v530 = vmul.f32 0.5, %v529
    %v531 = vsub.f32 1.5, %v530
    %v532 = vmul.f32 %v527, %v531
    %v533 = vmul.f32 %v514, %v532
    %vm534 = vcmp.eq.f32.partialorder %v514, inf
    %v535 = vsel %vm534, %v514, %v533
    %vm536 = vcmp.eq.f32.partialorder %v514, 0.0
    %v537 = vand.u32 %v514, 2147483648
    %v538 = vsel %vm536, %v537, %v535
    %v539 = vadd.f32 %v526, 1e-08
    %v540 = vadd.f32 %v538, 1e-08
    %v541 = vrcp.pop %v539
    %v542 = vmul.f32 %v539, %v541
    %v543 = vsub.f32 1.0, %v542
    %v544 = vmul.f32 %v541, %v543
    %v545 = vadd.f32 %v541, %v544
    %vm546 = vweird.f32 %v539
    %vm547 = vweird.f32 %v541
    %vm548 = vmor %vm546, %vm547
    %v549 = vsel %vm548, %v541, %v545
    %v550 = vand.u32 2147483647, %v539
    %vm551 = vcmp.eq.f32.partialorder %v550, 8.507059e+37
    %v552 = vand.u32 %v539, 2147483648
    %v553 = vor.u32 1.1754944e-38, %v552
    %v554 = vsel %vm551, %v553, %v549
    %v555 = vmul.f32 1.0, %v554
    %v556 = vrcp.pop %v540
    %v557 = vmul.f32 %v540, %v556
    %v558 = vsub.f32 1.0, %v557
    %v559 = vmul.f32 %v556, %v558
    %v560 = vadd.f32 %v556, %v559
    %vm561 = vweird.f32 %v540
    %vm562 = vweird.f32 %v556
    %vm563 = vmor %vm561, %vm562
    %v564 = vsel %vm563, %v556, %v560
    %v565 = vand.u32 2147483647, %v540
    %vm566 = vcmp.eq.f32.partialorder %v565, 8.507059e+37
    %v567 = vand.u32 %v540, 2147483648
    %v568 = vor.u32 1.1754944e-38, %v567
    %v569 = vsel %vm566, %v568, %v564
    %v570 = vmul.f32 1.0, %v569
    %s571 = scalar_lea.vmem %s0, 48
    %v572 = vld [vmem:[%s571] sm:$0xff]
    %v573 = vld [vmem:[%s571 + $0x8] sm:$0xff]
    %s574 = scalar_lea.vmem %s1, 96
    %v575 = vld [vmem:[%s574] sm:$0xff]
    %v576 = vld [vmem:[%s574 + $0x8] sm:$0xff]
    %v577 = vld [vmem:[%s574 + $0x10] sm:$0xff]
    %v578 = vld [vmem:[%s574 + $0x18] sm:$0xff]
    %s579 = scalar_lea.vmem %s2, 3
    %v580 = vld [vmem:[%s579] sm:$0x1]
    %v582 = vperm.slane %v580, 0
    %v585 = vsel %vm59, %v572, 0
    %v588 = vsel %vm59, %v573, 0
    %590 = vmatpush.msra.mxu0 0.0
    %591 = vmatpush.msra.mxu0 0.0
    %592 = vmatpush.msra.mxu0 0.0
    %593 = vmatpush.msra.mxu0 0.0
    %594 = vmatpush.msra.mxu0 0.0
    %595 = vmatpush.msra.mxu0 0.0
    %596 = vmatpush.msra.mxu0 0.0
    %597 = vmatpush.msra.mxu0 0.0
    %598 = vmatpush.msra.mxu0 0.0
    %599 = vmatpush.msra.mxu0 0.0
    %600 = vmatpush.msra.mxu0 0.0
    %601 = vmatpush.msra.mxu0 0.0
    %602 = vmatpush.msra.mxu0 %v578
    %603 = vmatpush.msra.mxu0 %v577
    %604 = vmatpush.msra.mxu0 %v576
    %605 = vmatpush.msra.mxu0 %v575
    %606 = vmatmul.f32.gmra.mxu0 %v585
    %v607 = vpop.f32.mrf.mxu0
    %v608 = vadd.f32 %v582, %v607
    %609 = vmatmul.f32.gmra.mxu0 %v588
    %v610 = vpop.f32.mrf.mxu0
    %v611 = vadd.f32 %v582, %v610
    %612 = vdwg.mxu0
    %v613 = vsel %vm89, %v608, 0.0
    %614 = vadd.xlane.f32.xlu0 %v613
    %v615 = vpop.xlane.xlu0 %614
    %v616 = vsel %vm89, %v611, 0.0
    %617 = vadd.xlane.f32.xlu0 %v616
    %v618 = vpop.xlane.xlu0 %617
    %v619 = vmul.f32 %v615, %v102
    %v620 = vmul.f32 %v618, %v102
    %v621 = vmul.f32 %v608, %v608
    %v622 = vmul.f32 %v611, %v611
    %v623 = vsel %vm89, %v621, 0.0
    %624 = vadd.xlane.f32.xlu0 %v623
    %v625 = vpop.xlane.xlu0 %624
    %v626 = vsel %vm89, %v622, 0.0
    %627 = vadd.xlane.f32.xlu0 %v626
    %v628 = vpop.xlane.xlu0 %627
    %v629 = vmul.f32 %v625, %v102
    %v630 = vmul.f32 %v628, %v102
    %v631 = vmul.f32 %v619, %v619
    %v632 = vmul.f32 %v620, %v620
    %v633 = vsub.f32 %v629, %v631
    %v634 = vsub.f32 %v630, %v632
    %v635 = vmax.f32 %v633, 0.0
    %v636 = vmax.f32 %v634, 0.0
    %v637 = vsub.f32 %v608, %v619
    %v638 = vsub.f32 %v611, %v620
    %v639 = vadd.f32 %v635, 1e-05
    %v640 = vadd.f32 %v636, 1e-05
    %v641 = vrsqrt.pop %v639
    %v642 = vmul.f32 %v641, %v639
    %v643 = vmul.f32 %v642, %v641
    %v644 = vmul.f32 0.5, %v643
    %v645 = vsub.f32 1.5, %v644
    %v646 = vmul.f32 %v641, %v645
    %vm647 = vweird.f32 %v639
    %vm648 = vweird.f32 %v641
    %vm649 = vmor %vm647, %vm648
    %v650 = vsel %vm649, %v641, %v646
    %v651 = vrsqrt.pop %v640
    %v652 = vmul.f32 %v651, %v640
    %v653 = vmul.f32 %v652, %v651
    %v654 = vmul.f32 0.5, %v653
    %v655 = vsub.f32 1.5, %v654
    %v656 = vmul.f32 %v651, %v655
    %vm657 = vweird.f32 %v640
    %vm658 = vweird.f32 %v651
    %vm659 = vmor %vm657, %vm658
    %v660 = vsel %vm659, %v651, %v656
    %v661 = vmul.f32 %v637, %v650
    %v662 = vmul.f32 %v638, %v660
    %s663 = scalar_lea.vmem %s3, 3
    %v664 = vld [vmem:[%s663] sm:$0x1]
    %v666 = vperm.slane %v664, 0
    %v668 = vmul.f32 %v661, %v666
    %v669 = vmul.f32 %v662, %v666
    %s670 = scalar_lea.vmem %s4, 3
    %v671 = vld [vmem:[%s670] sm:$0x1]
    %v673 = vperm.slane %v671, 0
    %v675 = vadd.f32 %v668, %v673
    %v676 = vadd.f32 %v669, %v673
    %s677 = scalar_lea.vmem [#allocation2], 48
    %678 = vst.msk [vmem:[%s677] sm:$0xff] %vm89, %v675
    %679 = vst.msk [vmem:[%s677 + $0x8] sm:$0xff] %vm89, %v676
    %v680 = vld [vmem:[%s677] sm:$0xff]
    %v681 = vld [vmem:[%s677 + $0x8] sm:$0xff]
    %v682 = vld [vmem:[#allocation2] sm:$0xff]
    %v683 = vld [vmem:[#allocation2 + $0x8] sm:$0xff]
    %v684 = vmul.f32 %v682, %v682
    %v685 = vmul.f32 %v683, %v683
    %v686 = vsel %vm89, %v684, 0.0
    %687 = vadd.xlane.f32.xlu0 %v686
    %v688 = vpop.xlane.xlu0 %687
    %v689 = vsel %vm89, %v685, 0.0
    %690 = vadd.xlane.f32.xlu0 %v689
    %v691 = vpop.xlane.xlu0 %690
    %v692 = vmul.f32 %v209, %v209
    %v693 = vmul.f32 %v224, %v224
    %v694 = vmul.f32 %v688, %v692
    %v695 = vmul.f32 %v691, %v693
    %v696 = vmax.f32 %v694, 0.0
    %v697 = vmax.f32 %v695, 0.0
    %v698 = vld [vmem:[%s331] sm:$0xff]
    %v699 = vld [vmem:[%s331 + $0x8] sm:$0xff]
    %v700 = vmul.f32 %v682, %v698
    %v701 = vmul.f32 %v683, %v699
    %v702 = vsel %vm89, %v700, 0.0
    %703 = vadd.xlane.f32.xlu0 %v702
    %v704 = vpop.xlane.xlu0 %703
    %v705 = vsel %vm89, %v701, 0.0
    %706 = vadd.xlane.f32.xlu0 %v705
    %v707 = vpop.xlane.xlu0 %706
    %v708 = vmul.f32 %v209, %v382
    %v709 = vmul.f32 %v224, %v397
    %v710 = vmul.f32 %v704, %v708
    %v711 = vmul.f32 %v707, %v709
    %v712 = vmax.f32 %v710, 0.0
    %v713 = vmax.f32 %v711, 0.0
    %v714 = vadd.f32 %v696, %v712
    %v715 = vadd.f32 %v697, %v713
    %v716 = vld [vmem:[%s504] sm:$0xff]
    %v717 = vld [vmem:[%s504 + $0x8] sm:$0xff]
    %v718 = vmul.f32 %v682, %v716
    %v719 = vmul.f32 %v683, %v717
    %v720 = vsel %vm89, %v718, 0.0
    %721 = vadd.xlane.f32.xlu0 %v720
    %v722 = vpop.xlane.xlu0 %721
    %v723 = vsel %vm89, %v719, 0.0
    %724 = vadd.xlane.f32.xlu0 %v723
    %v725 = vpop.xlane.xlu0 %724
    %v726 = vmul.f32 %v209, %v555
    %v727 = vmul.f32 %v224, %v570
    %v728 = vmul.f32 %v722, %v726
    %v729 = vmul.f32 %v725, %v727
    %v730 = vmax.f32 %v728, 0.0
    %v731 = vmax.f32 %v729, 0.0
    %v732 = vadd.f32 %v714, %v730
    %v733 = vadd.f32 %v715, %v731
    %v734 = vmul.f32 %v698, %v698
    %v735 = vmul.f32 %v699, %v699
    %v736 = vsel %vm89, %v734, 0.0
    %737 = vadd.xlane.f32.xlu0 %v736
    %v738 = vpop.xlane.xlu0 %737
    %v739 = vsel %vm89, %v735, 0.0
    %740 = vadd.xlane.f32.xlu0 %v739
    %v741 = vpop.xlane.xlu0 %740
    %v742 = vmul.f32 %v382, %v382
    %v743 = vmul.f32 %v397, %v397
    %v744 = vmul.f32 %v738, %v742
    %v745 = vmul.f32 %v741, %v743
    %v746 = vmax.f32 %v744, 0.0
    %v747 = vmax.f32 %v745, 0.0
    %v748 = vadd.f32 %v712, %v746
    %v749 = vadd.f32 %v713, %v747
    %v750 = vmul.f32 %v698, %v716
    %v751 = vmul.f32 %v699, %v717
    %v752 = vsel %vm89, %v750, 0.0
    %753 = vadd.xlane.f32.xlu0 %v752
    %v754 = vpop.xlane.xlu0 %753
    %v755 = vsel %vm89, %v751, 0.0
    %756 = vadd.xlane.f32.xlu0 %v755
    %v757 = vpop.xlane.xlu0 %756
    %v758 = vmul.f32 %v382, %v555
    %v759 = vmul.f32 %v397, %v570
    %v760 = vmul.f32 %v754, %v758
    %v761 = vmul.f32 %v757, %v759
    %v762 = vmax.f32 %v760, 0.0
    %v763 = vmax.f32 %v761, 0.0
    %v764 = vadd.f32 %v748, %v762
    %v765 = vadd.f32 %v749, %v763
    %v766 = vadd.f32 %v730, %v762
    %v767 = vadd.f32 %v731, %v763
    %v768 = vmul.f32 %v716, %v716
    %v769 = vmul.f32 %v717, %v717
    %v770 = vsel %vm89, %v768, 0.0
    %771 = vadd.xlane.f32.xlu0 %v770
    %v772 = vpop.xlane.xlu0 %771
    %v773 = vsel %vm89, %v769, 0.0
    %774 = vadd.xlane.f32.xlu0 %v773
    %v775 = vpop.xlane.xlu0 %774
    %v776 = vmul.f32 %v555, %v555
    %v777 = vmul.f32 %v570, %v570
    %v778 = vmul.f32 %v772, %v776
    %v779 = vmul.f32 %v775, %v777
    %v780 = vmax.f32 %v778, 0.0
    %v781 = vmax.f32 %v779, 0.0
    %v782 = vadd.f32 %v766, %v780
    %v783 = vadd.f32 %v767, %v781
    %v784 = vld [vmem:[%s5] sm:$0x1]
    %v785 = vld [vmem:[#allocation3] sm:$0x1]
    %v787 = vperm.slane %v784, 0
    %v789 = vmul.f32 %v680, %v787
    %v790 = vmul.f32 %v681, %v787
    %v791 = vmul.f32 %v682, %v789
    %v792 = vmul.f32 %v683, %v790
    %v793 = vsel %vm89, %v791, 0.0
    %794 = vadd.xlane.f32.xlu0 %v793
    %v795 = vpop.xlane.xlu0 %794
    %v796 = vsel %vm89, %v792, 0.0
    %797 = vadd.xlane.f32.xlu0 %v796
    %v798 = vpop.xlane.xlu0 %797
    %v800 = vperm.slane %v785, 0
    %v802 = vadd.f32 %v795, %v800
    %v803 = vadd.f32 %v798, %v800
    %v804 = vmax.f32 %v802, 0.0
    %v805 = vmax.f32 %v803, 0.0
    %v806 = vrcp.pop %v732
    %v807 = vmul.f32 %v732, %v806
    %v808 = vsub.f32 1.0, %v807
    %v809 = vmul.f32 %v806, %v808
    %v810 = vadd.f32 %v806, %v809
    %vm811 = vweird.f32 %v732
    %vm812 = vweird.f32 %v806
    %vm813 = vmor %vm811, %vm812
    %v814 = vsel %vm813, %v806, %v810
    %v815 = vand.u32 2147483647, %v732
    %vm816 = vcmp.eq.f32.partialorder %v815, 8.507059e+37
    %v817 = vand.u32 %v732, 2147483648
    %v818 = vor.u32 1.1754944e-38, %v817
    %v819 = vsel %vm816, %v818, %v814
    %v820 = vmul.f32 %v804, %v819
    %v821 = vrcp.pop %v733
    %v822 = vmul.f32 %v733, %v821
    %v823 = vsub.f32 1.0, %v822
    %v824 = vmul.f32 %v821, %v823
    %v825 = vadd.f32 %v821, %v824
    %vm826 = vweird.f32 %v733
    %vm827 = vweird.f32 %v821
    %vm828 = vmor %vm826, %vm827
    %v829 = vsel %vm828, %v821, %v825
    %v830 = vand.u32 2147483647, %v733
    %vm831 = vcmp.eq.f32.partialorder %v830, 8.507059e+37
    %v832 = vand.u32 %v733, 2147483648
    %v833 = vor.u32 1.1754944e-38, %v832
    %v834 = vsel %vm831, %v833, %v829
    %v835 = vmul.f32 %v805, %v834
    %v836 = vmul.f32 %v698, %v789
    %v837 = vmul.f32 %v699, %v790
    %v838 = vsel %vm89, %v836, 0.0
    %839 = vadd.xlane.f32.xlu0 %v838
    %v840 = vpop.xlane.xlu0 %839
    %v841 = vsel %vm89, %v837, 0.0
    %842 = vadd.xlane.f32.xlu0 %v841
    %v843 = vpop.xlane.xlu0 %842
    %v844 = vadd.f32 %v840, %v800
    %v845 = vadd.f32 %v843, %v800
    %v846 = vmax.f32 %v844, 0.0
    %v847 = vmax.f32 %v845, 0.0
    %v848 = vrcp.pop %v764
    %v849 = vmul.f32 %v764, %v848
    %v850 = vsub.f32 1.0, %v849
    %v851 = vmul.f32 %v848, %v850
    %v852 = vadd.f32 %v848, %v851
    %vm853 = vweird.f32 %v764
    %vm854 = vweird.f32 %v848
    %vm855 = vmor %vm853, %vm854
    %v856 = vsel %vm855, %v848, %v852
    %v857 = vand.u32 2147483647, %v764
    %vm858 = vcmp.eq.f32.partialorder %v857, 8.507059e+37
    %v859 = vand.u32 %v764, 2147483648
    %v860 = vor.u32 1.1754944e-38, %v859
    %v861 = vsel %vm858, %v860, %v856
    %v862 = vmul.f32 %v846, %v861
    %v863 = vrcp.pop %v765
    %v864 = vmul.f32 %v765, %v863
    %v865 = vsub.f32 1.0, %v864
    %v866 = vmul.f32 %v863, %v865
    %v867 = vadd.f32 %v863, %v866
    %vm868 = vweird.f32 %v765
    %vm869 = vweird.f32 %v863
    %vm870 = vmor %vm868, %vm869
    %v871 = vsel %vm870, %v863, %v867
    %v872 = vand.u32 2147483647, %v765
    %vm873 = vcmp.eq.f32.partialorder %v872, 8.507059e+37
    %v874 = vand.u32 %v765, 2147483648
    %v875 = vor.u32 1.1754944e-38, %v874
    %v876 = vsel %vm873, %v875, %v871
    %v877 = vmul.f32 %v847, %v876
    %v878 = vmul.f32 %v716, %v789
    %v879 = vmul.f32 %v717, %v790
    %v880 = vsel %vm89, %v878, 0.0
    %881 = vadd.xlane.f32.xlu0 %v880
    %v882 = vpop.xlane.xlu0 %881
    %v883 = vsel %vm89, %v879, 0.0
    %884 = vadd.xlane.f32.xlu0 %v883
    %v885 = vpop.xlane.xlu0 %884
    %v886 = vadd.f32 %v882, %v800
    %v887 = vadd.f32 %v885, %v800
    %v888 = vmax.f32 %v886, 0.0
    %v889 = vmax.f32 %v887, 0.0
    %v890 = vrcp.pop %v782
    %v891 = vmul.f32 %v782, %v890
    %v892 = vsub.f32 1.0, %v891
    %v893 = vmul.f32 %v890, %v892
    %v894 = vadd.f32 %v890, %v893
    %vm895 = vweird.f32 %v782
    %vm896 = vweird.f32 %v890
    %vm897 = vmor %vm895, %vm896
    %v898 = vsel %vm897, %v890, %v894
    %v899 = vand.u32 2147483647, %v782
    %vm900 = vcmp.eq.f32.partialorder %v899, 8.507059e+37
    %v901 = vand.u32 %v782, 2147483648
    %v902 = vor.u32 1.1754944e-38, %v901
    %v903 = vsel %vm900, %v902, %v898
    %v904 = vmul.f32 %v888, %v903
    %v905 = vrcp.pop %v783
    %v906 = vmul.f32 %v783, %v905
    %v907 = vsub.f32 1.0, %v906
    %v908 = vmul.f32 %v905, %v907
    %v909 = vadd.f32 %v905, %v908
    %vm910 = vweird.f32 %v783
    %vm911 = vweird.f32 %v905
    %vm912 = vmor %vm910, %vm911
    %v913 = vsel %vm912, %v905, %v909
    %v914 = vand.u32 2147483647, %v783
    %vm915 = vcmp.eq.f32.partialorder %v914, 8.507059e+37
    %v916 = vand.u32 %v783, 2147483648
    %v917 = vor.u32 1.1754944e-38, %v916
    %v918 = vsel %vm915, %v917, %v913
    %v919 = vmul.f32 %v889, %v918
    %v920 = vadd.f32 %v820, %v862
    %v921 = vadd.f32 %v835, %v877
    %v922 = vadd.f32 %v920, %v904
    %v923 = vadd.f32 %v921, %v919
    %v924 = vadd.f32 %v922, 1e-08
    %v925 = vadd.f32 %v923, 1e-08
    %v926 = vrcp.pop %v924
    %v927 = vmul.f32 %v924, %v926
    %v928 = vsub.f32 1.0, %v927
    %v929 = vmul.f32 %v926, %v928
    %v930 = vadd.f32 %v926, %v929
    %vm931 = vweird.f32 %v924
    %vm932 = vweird.f32 %v926
    %vm933 = vmor %vm931, %vm932
    %v934 = vsel %vm933, %v926, %v930
    %v935 = vand.u32 2147483647, %v924
    %vm936 = vcmp.eq.f32.partialorder %v935, 8.507059e+37
    %v937 = vand.u32 %v924, 2147483648
    %v938 = vor.u32 1.1754944e-38, %v937
    %v939 = vsel %vm936, %v938, %v934
    %v940 = vmul.f32 1.0, %v939
    %v941 = vrcp.pop %v925
    %v942 = vmul.f32 %v925, %v941
    %v943 = vsub.f32 1.0, %v942
    %v944 = vmul.f32 %v941, %v943
    %v945 = vadd.f32 %v941, %v944
    %vm946 = vweird.f32 %v925
    %vm947 = vweird.f32 %v941
    %vm948 = vmor %vm946, %vm947
    %v949 = vsel %vm948, %v941, %v945
    %v950 = vand.u32 2147483647, %v925
    %vm951 = vcmp.eq.f32.partialorder %v950, 8.507059e+37
    %v952 = vand.u32 %v925, 2147483648
    %v953 = vor.u32 1.1754944e-38, %v952
    %v954 = vsel %vm951, %v953, %v949
    %v955 = vmul.f32 1.0, %v954
    %v956 = vmul.f32 %v820, %v940
    %v957 = vmul.f32 %v835, %v955
    %959 = vset.pattern.permute.xlu0 0
    %960 = vperm.xlu0 %959, %v956
    %v961 = vpop.permute.xlu0 %960
    %964 = vset.pattern.permute.xlu0 0
    %965 = vperm.xlu0 %964, %v957
    %v966 = vpop.permute.xlu0 %965
    %v968 = vmul.f32 %v961, %v682
    %v969 = vmul.f32 %v966, %v683
    %v970 = vadd.f32 %v680, %v968
    %v971 = vadd.f32 %v681, %v969
    %v972 = vmul.f32 %v862, %v940
    %v973 = vmul.f32 %v877, %v955
    %975 = vset.pattern.permute.xlu0 0
    %976 = vperm.xlu0 %975, %v972
    %v977 = vpop.permute.xlu0 %976
    %980 = vset.pattern.permute.xlu0 0
    %981 = vperm.xlu0 %980, %v973
    %v982 = vpop.permute.xlu0 %981
    %v984 = vmul.f32 %v977, %v698
    %v985 = vmul.f32 %v982, %v699
    %v986 = vadd.f32 %v970, %v984
    %v987 = vadd.f32 %v971, %v985
    %v988 = vmul.f32 %v904, %v940
    %v989 = vmul.f32 %v919, %v955
    %991 = vset.pattern.permute.xlu0 0
    %992 = vperm.xlu0 %991, %v988
    %v993 = vpop.permute.xlu0 %992
    %996 = vset.pattern.permute.xlu0 0
    %997 = vperm.xlu0 %996, %v989
    %v998 = vpop.permute.xlu0 %997
    %v1000 = vmul.f32 %v993, %v716
    %v1001 = vmul.f32 %v998, %v717
    %v1002 = vadd.f32 %v986, %v1000
    %v1003 = vadd.f32 %v987, %v1001
    %v1004 = vmax.f32 %v1002, 0.0
    %v1005 = vmax.f32 %v1003, 0.0
    %v1006 = vld [vmem:[%s7] sm:$0xff]
    %v1007 = vld [vmem:[%s8] sm:$0x1]
    %v1009 = vperm.slane %v1007, 0
    %v1012 = vsel %vm89, %v1004, 0
    %v1015 = vsel %vm89, %v1005, 0
    %1017 = vmatpush.msra.mxu0 0.0
    %1018 = vmatpush.msra.mxu0 0.0
    %1019 = vmatpush.msra.mxu0 0.0
    %1020 = vmatpush.msra.mxu0 0.0
    %1021 = vmatpush.msra.mxu0 0.0
    %1022 = vmatpush.msra.mxu0 0.0
    %1023 = vmatpush.msra.mxu0 0.0
    %1024 = vmatpush.msra.mxu0 0.0
    %1025 = vmatpush.msra.mxu0 0.0
    %1026 = vmatpush.msra.mxu0 0.0
    %1027 = vmatpush.msra.mxu0 0.0
    %1028 = vmatpush.msra.mxu0 0.0
    %1029 = vmatpush.msra.mxu0 0.0
    %1030 = vmatpush.msra.mxu0 0.0
    %1031 = vmatpush.msra.mxu0 0.0
    %1032 = vmatpush.msra.mxu0 %v1006
    %1033 = vmatmul.f32.gmra.mxu0 %v1012
    %v1034 = vpop.f32.mrf.mxu0
    %v1035 = vadd.f32 %v1009, %v1034
    %1036 = vmatmul.f32.gmra.mxu0 %v1015
    %v1037 = vpop.f32.mrf.mxu0
    %v1038 = vadd.f32 %v1009, %v1037
    %1039 = vdwg.mxu0
    %v1040 = vsel %vm59, %v1035, 0.0
    %1041 = vadd.xlane.f32.xlu0 %v1040
    %v1042 = vpop.xlane.xlu0 %1041
    %v1043 = vsel %vm59, %v1038, 0.0
    %1044 = vadd.xlane.f32.xlu0 %v1043
    %v1045 = vpop.xlane.xlu0 %1044
    %v1046 = vrcp.pop 32.0
    %v1047 = vmul.f32 32.0, %v1046
    %v1048 = vsub.f32 1.0, %v1047
    %v1049 = vmul.f32 %v1046, %v1048
    %v1050 = vadd.f32 %v1046, %v1049
    %vm1051 = vweird.f32 %v1046
    %v1052 = vsel %vm1051, %v1046, %v1050
    %v1053 = vmul.f32 %v1042, %v1052
    %v1054 = vmul.f32 %v1045, %v1052
    %v1055 = vmul.f32 %v1035, %v1035
    %v1056 = vmul.f32 %v1038, %v1038
    %v1057 = vsel %vm59, %v1055, 0.0
    %1058 = vadd.xlane.f32.xlu0 %v1057
    %v1059 = vpop.xlane.xlu0 %1058
    %v1060 = vsel %vm59, %v1056, 0.0
    %1061 = vadd.xlane.f32.xlu0 %v1060
    %v1062 = vpop.xlane.xlu0 %1061
    %v1063 = vmul.f32 %v1059, %v1052
    %v1064 = vmul.f32 %v1062, %v1052
    %v1065 = vmul.f32 %v1053, %v1053
    %v1066 = vmul.f32 %v1054, %v1054
    %v1067 = vsub.f32 %v1063, %v1065
    %v1068 = vsub.f32 %v1064, %v1066
    %v1069 = vmax.f32 %v1067, 0.0
    %v1070 = vmax.f32 %v1068, 0.0
    %v1071 = vsub.f32 %v1035, %v1053
    %v1072 = vsub.f32 %v1038, %v1054
    %v1073 = vadd.f32 %v1069, 1e-12
    %v1074 = vadd.f32 %v1070, 1e-12
    %v1075 = vrsqrt.pop %v1073
    %v1076 = vmul.f32 %v1075, %v1073
    %v1077 = vmul.f32 %v1076, %v1075
    %v1078 = vmul.f32 0.5, %v1077
    %v1079 = vsub.f32 1.5, %v1078
    %v1080 = vmul.f32 %v1075, %v1079
    %vm1081 = vweird.f32 %v1073
    %vm1082 = vweird.f32 %v1075
    %vm1083 = vmor %vm1081, %vm1082
    %v1084 = vsel %vm1083, %v1075, %v1080
    %v1085 = vrsqrt.pop %v1074
    %v1086 = vmul.f32 %v1085, %v1074
    %v1087 = vmul.f32 %v1086, %v1085
    %v1088 = vmul.f32 0.5, %v1087
    %v1089 = vsub.f32 1.5, %v1088
    %v1090 = vmul.f32 %v1085, %v1089
    %vm1091 = vweird.f32 %v1074
    %vm1092 = vweird.f32 %v1085
    %vm1093 = vmor %vm1091, %vm1092
    %v1094 = vsel %vm1093, %v1085, %v1090
    %v1095 = vmul.f32 %v1071, %v1084
    %v1096 = vmul.f32 %v1072, %v1094
    %v1097 = vld [vmem:[%s9] sm:$0x1]
    %v1099 = vperm.slane %v1097, 0
    %v1101 = vmul.f32 %v1095, %v1099
    %v1102 = vmul.f32 %v1096, %v1099
    %v1103 = vld [vmem:[%s10] sm:$0x1]
    %v1105 = vperm.slane %v1103, 0
    %v1107 = vadd.f32 %v1101, %v1105
    %v1108 = vadd.f32 %v1102, %v1105
    %v1109 = vld [vmem:[#allocation4] sm:$0x1]
    %v1110 = vld [vmem:[%s11] sm:$0xff]
    %v1111 = vld [vmem:[%s11 + $0x8] sm:$0xff]
    %v1113 = vperm.slane %v1109, 0
    %1114 = vset.pattern.permute.xlu0 0
    %1115 = vperm.xlu0 %1114, %v1113
    %v1116 = vpop.permute.xlu0 %1115
    %v1118 = vmul.f32 %v1116, %v1110
    %v1119 = vmul.f32 %v1116, %v1111
    %v1120 = vadd.f32 %v1107, %v1118
    %v1121 = vadd.f32 %v1108, %v1119
    %1122 = vst.msk [vmem:[#allocation5] sm:$0xff] %vm59, %v1120
    %1123 = vst.msk [vmem:[#allocation5 + $0x8] sm:$0xff] %vm59, %v1121
    // Predicated region
    $region54: #{tpu_custom_call.1} parent=1 // pred_check
      _
    $region55: #{tpu_custom_call.1} parent=1 // pred_check_branch
      %1125 = sbr.rel (0) target = $region57
    $region56: #{tpu_custom_call.1} parent=1 // pred_region
      %1127 = vsyncadd [#allocation6], 0
      %s1128 = sshll.u32 [#allocation5], 4
      %s1129 = int_to_ptr.vmem [resolvable:$true] %s1128
      %s1130 = sshll.u32 %s13, 4
      %s1131 = int_to_ptr.hbm [resolvable:$true] %s1130
      %1136 = dma.vmem_to_hbm [thread:$0]  %s1129, 256, %s1131, [#allocation6], 128, 128, 8
    $region57: #{tpu_custom_call.1} parent=1 // pred_fallthru
      _
    // Predicated region
    $region58: #{tpu_custom_call.1} parent=1 // pred_check
      _
    $region59: #{tpu_custom_call.1} parent=1 // pred_check_branch
      %1138 = sbr.rel (0) target = $region61
    $region60: #{tpu_custom_call.1} parent=1 // pred_region
      %1140 = dma.done [#allocation6], 256
    $region61: #{tpu_custom_call.1} parent=1 // pred_fallthru
      _
    %1141 = vsyncpa [#allocation6], 1

</llo_original>
